<compile_context>
chip_gen: v6e
topology: v6e:2x2x1
jax: 0.10.0
libtpu: 0.0.40
codegen_flags: <defaults>
</compile_context>

<pallas_src>
import numpy as np
import jax
import jax.numpy as jnp
from jax import lax
from jax.experimental import pallas as pl
from jax.experimental.pallas import tpu as pltpu


# --------------------------- parameter packing ----------------------------- #

def _pack_params(params, C, L, NC):
    """Fold eval-mode BatchNorm into the preceding conv/linear weights, reshape
    conv weights to fused-tap (3*Cin, Cout) form, and pack everything into one
    (rows, 128) f32 buffer.  Returns (buffer, {name: (row_off, rows, cols)})."""

    def conv_entry(w3, s=None, sh=None, bias=None):
        w3 = np.asarray(w3, np.float32)                  # (3, Cout, Cin)
        _, Cout, Cin = w3.shape
        wf = np.transpose(w3, (0, 2, 1)).reshape(3 * Cin, Cout)   # rows: tap-major, cin-minor
        if s is not None:
            sv = np.asarray(s, np.float32).reshape(Cout)
            wf = wf * sv[None, :]
            b = np.asarray(sh, np.float32).reshape(1, Cout)
        else:
            b = np.asarray(bias, np.float32).reshape(1, Cout)
        return wf, b

    def lin_entry(wt, s=None, sh=None, bias=None):
        wt = np.asarray(wt, np.float32)                  # (Fin, Fout)
        Fout = wt.shape[1]
        if s is not None:
            wf = wt * np.asarray(s, np.float32).reshape(1, Fout)
            b = np.asarray(sh, np.float32).reshape(1, Fout)
        else:
            wf = wt
            b = np.asarray(bias, np.float32).reshape(1, Fout)
        return wf, b

    p = params
    entries = []

    def add(name, arr):
        entries.append((name, np.asarray(arr, np.float32)))

    # features_up: 4x conv+BN+ReLU+pool, then conv(32->1)
    for i, (wk, sk, hk) in enumerate(
            [("uw1", "us1", "uh1"), ("uw2", "us2", "uh2"),
             ("uw3", "us3", "uh3"), ("uw4", "us4", "uh4")], 1):
        w, b = conv_entry(p[wk], p[sk], p[hk]); add(f"up{i}_w", w); add(f"up{i}_b", b)
    w, b = conv_entry(p["uw5"], bias=p["ub5"]); add("up5_w", w); add("up5_b", b)

    # features_mix convs: 2x conv+BN+ReLU+pool, then conv(16->1)
    for i, (wk, sk, hk) in enumerate(
            [("mw1", "ms1", "mh1"), ("mw2", "ms2", "mh2")], 1):
        w, b = conv_entry(p[wk], p[sk], p[hk]); add(f"mx{i}_w", w); add(f"mx{i}_b", b)
    w, b = conv_entry(p["mw3"], bias=p["mb3"]); add("mx3_w", w); add("mx3_b", b)

    # features_down linears
    for i, (wk, sk, hk) in enumerate(
            [("dw1", "ds1", "dh1"), ("dw2", "ds2", "dh2")], 1):
        w, b = lin_entry(p[wk], p[sk], p[hk]); add(f"dn{i}_w", w); add(f"dn{i}_b", b)
    w, b = lin_entry(p["dw3"], bias=p["db3"]); add("dn3_w", w); add("dn3_b", b)

    # features_mix linears
    w, b = lin_entry(p["mlw1"], p["mls1"], p["mlh1"]); add("ml1_w", w); add("ml1_b", b)
    w, b = lin_entry(p["mlw2"], bias=p["mlb2"]); add("ml2_w", w); add("ml2_b", b)

    # classifier (lanes zero-padded to 128 by the packer -> lane-dense output)
    w, b = lin_entry(p["cw"], bias=p["cb"]); add("cls_w", w); add("cls_b", b)

    layout = {}
    blocks = []
    row = 0
    for name, arr in entries:
        r, c = arr.shape
        assert c <= 128, f"{name} has {c} columns (>128)"
        r8 = ((r + 7) // 8) * 8                  # 8-align row offsets (sublane tiles)
        layout[name] = (row, r, c)
        blk = np.zeros((r8, 128), np.float32)
        blk[:r, :c] = arr
        blocks.append(blk)
        row += r8
    pbuf = jnp.asarray(np.concatenate(blocks, axis=0))
    return pbuf, layout


def _pick_bt(B):
    # As large a batch tile as possible (amortize per-step overhead, fill MXU M),
    # but keep >=2 grid steps when B >= 2 so both v7x TensorCores get work.
    if B <= 1:
        return 1
    best = 1
    for bt in range(1, min(8, B // 2) + 1):
        if B % bt == 0:
            best = bt
    return best


# ----------------------------- Pallas kernel ------------------------------- #

def _make_kernel(Bt, C, L, NC, layout):
    f32 = jnp.float32
    L16 = L // 16

    def kernel(xr_ref, xf_ref, pb_ref, out_ref, pool_ref):
        def getp(name):
            off, r, c = layout[name]
            return pb_ref[off:off + r, :c]

        def conv_bn_relu(a, L_cur, wname, bname, relu=True):
            # Fused 3-tap Conv1d(pad=1) [+ folded BN] [+ ReLU] as ONE MXU matmul.
            # a: (R, Cin), rows = (sample, position). Shifts via sublane roll
            # (XLU) + per-sample edge masks (zero padding at sequence edges).
            R = a.shape[0]
            rid = lax.broadcasted_iota(jnp.int32, (R, 1), 0)
            pos = jnp.bitwise_and(rid, L_cur - 1)            # position within sample
            a_m1 = jnp.where(pos != 0, pltpu.roll(a, 1, axis=0), 0.0)
            a_p1 = jnp.where(pos != (L_cur - 1), pltpu.roll(a, R - 1, axis=0), 0.0)
            acat = jnp.concatenate([a_m1, a, a_p1], axis=1)  # (R, 3*Cin)
            h = jnp.dot(acat, getp(wname), preferred_element_type=f32) + getp(bname)
            return jnp.maximum(h, 0.0) if relu else h

        def maxpool2(a):
            # MaxPool1d(2): pairwise max of adjacent rows, keep even rows via a
            # stride-2 VMEM load (no downsample matmul, no reshape).
            R, Cc = a.shape
            pm = jnp.maximum(a, pltpu.roll(a, R - 1, axis=0))   # pm[r] = max(a[r], a[r+1])
            pool_ref[:R, :Cc] = pm
            return pool_ref[pl.ds(0, R // 2, stride=2), pl.ds(0, Cc)]

        def rows_to_lanes(col, K):
            # (Bt*K, 1) single-channel, sample-major rows -> (Bt, K) lanes
            # (PyTorch Flatten order), via one tiny 0/1-select matmul.
            R = col.shape[0]
            rid = lax.broadcasted_iota(jnp.int32, (R, K), 0)
            cid = lax.broadcasted_iota(jnp.int32, (R, K), 1)
            scat = jnp.where(jnp.bitwise_and(rid, K - 1) == cid, col, 0.0)   # (R, K)
            bi = lax.broadcasted_iota(jnp.int32, (Bt, R), 0)
            ri = lax.broadcasted_iota(jnp.int32, (Bt, R), 1)
            sel = jnp.logical_and(ri >= bi * K, ri < (bi + 1) * K).astype(f32)
            return jnp.dot(sel, scat, preferred_element_type=f32)            # (Bt, K)

        def linear(a, wname, bname, relu=False):
            h = jnp.dot(a, getp(wname), preferred_element_type=f32) + getp(bname)
            return jnp.maximum(h, 0.0) if relu else h

        x2d = xr_ref[...]            # (Bt*L, C): rows = (sample, position), lanes = channels
        xf = xf_ref[:, 0, :]         # (Bt, C*L): PyTorch Flatten (channel-major) order

        # ----------------------------- features_up ------------------------- #
        h = maxpool2(conv_bn_relu(x2d, L, "up1_w", "up1_b"))        # (Bt*L/2,  8)
        h = maxpool2(conv_bn_relu(h, L // 2, "up2_w", "up2_b"))     # (Bt*L/4, 16)
        h = maxpool2(conv_bn_relu(h, L // 4, "up3_w", "up3_b"))     # (Bt*L/8, 32)
        h = maxpool2(conv_bn_relu(h, L // 8, "up4_w", "up4_b"))     # (Bt*L/16,32)
        h = conv_bn_relu(h, L16, "up5_w", "up5_b", relu=False)      # (Bt*L/16, 1)
        out_up = rows_to_lanes(h, L16)                              # (Bt, L/16)

        # ---------------------------- features_down ------------------------ #
        d = linear(xf, "dn1_w", "dn1_b", relu=True)                 # (Bt, 64)
        d = linear(d, "dn2_w", "dn2_b", relu=True)                  # (Bt, 16)
        out_down = linear(d, "dn3_w", "dn3_b")                      # (Bt, L/16)

        # ---------------------------- features_mix ------------------------- #
        m = maxpool2(conv_bn_relu(x2d, L, "mx1_w", "mx1_b"))        # (Bt*L/2,  8)
        m = maxpool2(conv_bn_relu(m, L // 2, "mx2_w", "mx2_b"))     # (Bt*L/4, 16)
        m = conv_bn_relu(m, L // 4, "mx3_w", "mx3_b", relu=False)   # (Bt*L/4,  1)
        m = rows_to_lanes(m, L // 4)                                # (Bt, L/4)
        m = linear(m, "ml1_w", "ml1_b", relu=True)                  # (Bt, 32)
        out_mix = linear(m, "ml2_w", "ml2_b")                       # (Bt, L/16)

        # ----------------------------- classifier -------------------------- #
        mid = out_up + out_down + out_mix                           # (Bt, L/16)
        off, r, _ = layout["cls_w"]
        cw = pb_ref[off:off + r, :]                                 # (L/16, 128) zero-padded
        offb, rb, _ = layout["cls_b"]
        cb = pb_ref[offb:offb + rb, :]                              # (1, 128)
        out_ref[:, 0, :] = jnp.dot(mid, cw, preferred_element_type=f32) + cb

    return kernel


# ------------------------------ JAX wrapper -------------------------------- #

def zolotyh_forward(x, params):
    B, C, L = x.shape
    NC = params["cw"].shape[1]
    assert L >= 16 and (L & (L - 1)) == 0, "L must be a power of two >= 16"
    assert NC <= 128

    Bt = _pick_bt(B)
    grid = B // Bt
    pbuf, layout = _pack_params(params, C, L, NC)

    # host-side layout plumbing (cheap XLA ops, not kernel work)
    xr = jnp.transpose(x, (0, 2, 1)).reshape(B * L, C)   # rows=(sample,pos), lanes=channels
    xf = x.reshape(B, 1, C * L)                          # PyTorch Flatten (channel-major) order

    kernel = _make_kernel(Bt, C, L, NC, layout)

    out = pl.pallas_call(
        kernel,
        out_shape=jax.ShapeDtypeStruct((B, 1, 128), jnp.float32),   # lane-dense padded output
        grid=(grid,),
        in_specs=[
            pl.BlockSpec((Bt * L, C), lambda i: (i, 0)),
            pl.BlockSpec((Bt, 1, C * L), lambda i: (i, 0, 0)),
            pl.BlockSpec(pbuf.shape, lambda i: (0, 0)),             # packed params, fetched once
        ],
        out_specs=pl.BlockSpec((Bt, 1, 128), lambda i: (i, 0, 0)),
        scratch_shapes=[pltpu.VMEM((Bt * L, 32), jnp.float32)],     # maxpool staging buffer
        compiler_params=pltpu.CompilerParams(dimension_semantics=("parallel",)),
    )(xr, xf, pbuf)
    return out[:, 0, :NC]


# ---------------------- deterministic parameter init ----------------------- #

def init_params(key, L, C, NC):
    eps = 1e-5
    bn_scale = 1.0 / np.sqrt(1.0 + eps)      # gamma=1, running_var=1 (fresh BN stats)
    keys = iter(jax.random.split(key, 64))

    def w(shape, fan_in):
        return jax.random.normal(next(keys), shape, jnp.float32) / np.sqrt(fan_in)

    def b(shape):
        return jax.random.normal(next(keys), shape, jnp.float32) * 0.01

    def conv_bn(cin, cout):
        wk = w((3, cout, cin), cin * 3)      # (tap, Cout, Cin)
        bias = b((cout, 1))
        s = jnp.full((cout, 1), bn_scale, jnp.float32)
        sh = bias * bn_scale                 # beta=0, running_mean=0, conv bias folded
        return wk, s, sh

    def lin_bn(fin, fout):
        wt = w((fin, fout), fin)             # stored transposed: x @ wT
        bias = b((1, fout))
        s = jnp.full((1, fout), bn_scale, jnp.float32)
        sh = bias * bn_scale
        return wt, s, sh

    p = {}
    p["uw1"], p["us1"], p["uh1"] = conv_bn(C, 8)
    p["uw2"], p["us2"], p["uh2"] = conv_bn(8, 16)
    p["uw3"], p["us3"], p["uh3"] = conv_bn(16, 32)
    p["uw4"], p["us4"], p["uh4"] = conv_bn(32, 32)
    p["uw5"] = w((3, 1, 32), 32 * 3)
    p["ub5"] = b((1, 1))

    p["dw1"], p["ds1"], p["dh1"] = lin_bn(C * L, 64)
    p["dw2"], p["ds2"], p["dh2"] = lin_bn(64, 16)
    p["dw3"] = w((16, L // 16), 16)
    p["db3"] = b((1, L // 16))

    p["mw1"], p["ms1"], p["mh1"] = conv_bn(C, 8)
    p["mw2"], p["ms2"], p["mh2"] = conv_bn(8, 16)
    p["mw3"] = w((3, 1, 16), 16 * 3)
    p["mb3"] = b((1, 1))
    p["mlw1"], p["mls1"], p["mlh1"] = lin_bn(L // 4, 32)
    p["mlw2"] = w((32, L // 16), 32)
    p["mlb2"] = b((1, L // 16))

    p["cw"] = w((L // 16, NC), L // 16)
    p["cb"] = b((1, NC))
    return p


# ------------------------- pure-JAX reference (check) ---------------------- #

def ref_forward(x, p):
    B = x.shape[0]

    def conv(h, w3):  # w3: (3, Cout, Cin)
        w = jnp.transpose(w3, (1, 2, 0))     # (Cout, Cin, 3)
        return lax.conv_general_dilated(
            h, w, window_strides=(1,), padding=((1, 1),),
            dimension_numbers=("NCH", "OIH", "NCH"))

    def bnrelu(h, s, sh):
        return jnp.maximum(h * s[None] + sh[None], 0.0)

    def pool(h):
        b, c, l = h.shape
        return h.reshape(b, c, l // 2, 2).max(-1)

    up = pool(bnrelu(conv(x, p["uw1"]), p["us1"], p["uh1"]))
    up = pool(bnrelu(conv(up, p["uw2"]), p["us2"], p["uh2"]))
    up = pool(bnrelu(conv(up, p["uw3"]), p["us3"], p["uh3"]))
    up = pool(bnrelu(conv(up, p["uw4"]), p["us4"], p["uh4"]))
    up = (conv(up, p["uw5"]) + p["ub5"][None]).reshape(B, -1)

    d = x.reshape(B, -1)
    d = jnp.maximum(jnp.dot(d, p["dw1"]) * p["ds1"] + p["dh1"], 0.0)
    d = jnp.maximum(jnp.dot(d, p["dw2"]) * p["ds2"] + p["dh2"], 0.0)
    d = jnp.dot(d, p["dw3"]) + p["db3"]

    m = pool(bnrelu(conv(x, p["mw1"]), p["ms1"], p["mh1"]))
    m = pool(bnrelu(conv(m, p["mw2"]), p["ms2"], p["mh2"]))
    m = (conv(m, p["mw3"]) + p["mb3"][None]).reshape(B, -1)
    m = jnp.maximum(jnp.dot(m, p["mlw1"]) * p["mls1"] + p["mlh1"], 0.0)
    m = jnp.dot(m, p["mlw2"]) + p["mlb2"]

    mid = up + d + m
    return jnp.dot(mid, p["cw"]) + p["cb"]


# ---------------------------------- main ----------------------------------- #

if __name__ == "__main__":
    # input_shape = (L, C) = (64, 4)  ->  x is (B, C, L)
    B, C, L, NC = 2, 4, 64, 8
    key = jax.random.PRNGKey(0)
    kx, kp = jax.random.split(key)
    x = jax.random.normal(kx, (B, C, L), jnp.float32)
    params = init_params(kp, L, C, NC)

    out = zolotyh_forward(x, params)
    out = jax.block_until_ready(out)
    assert out.shape == (B, NC)

    with jax.default_matmul_precision("float32"):
        ref = jax.block_until_ready(ref_forward(x, params))

    if np.allclose(np.asarray(out), np.asarray(ref), rtol=1e-3, atol=1e-3):
        print("KERNEL_OK")
    else:
        print("MISMATCH max_abs_err=",
              float(np.max(np.abs(np.asarray(out) - np.asarray(ref)))))
</pallas_src>

<mosaic_0001>
module attributes {stable_mosaic.version = 11 : i64} {
  func.func @kernel(%arg0: i32, %arg1: memref<64x4xf32, #tpu.memory_space<vmem>>, %arg2: memref<1x1x256xf32, #tpu.memory_space<vmem>>, %arg3: memref<872x128xf32, #tpu.memory_space<vmem>>, %arg4: memref<1x1x128xf32, #tpu.memory_space<vmem>>, %arg5: memref<64x32xf32, #tpu.memory_space<vmem>>) attributes {dimension_semantics = [#tpu.dimension_semantics<parallel>], iteration_bounds = array<i64: 2>, scalar_prefetch = 0 : i64, scratch_operands = 1 : i64, tpu.core_type = #tpu.core_type<tc>, window_params = [{transform_indices = @transform_0, window_bounds = array<i64: 64, 4>}, {transform_indices = @transform_1, window_bounds = array<i64: 1, 1, 256>}, {pipeline_mode = #tpu.pipeline_mode<synchronous>, transform_indices = @transform_2, window_bounds = array<i64: 872, 128>}, {transform_indices = @transform_3, window_bounds = array<i64: 1, 1, 128>}]} {
    %c0 = arith.constant 0 : index
    %c0_0 = arith.constant 0 : index
    %0 = vector.load %arg1[%c0, %c0_0] : memref<64x4xf32, #tpu.memory_space<vmem>>, vector<64x4xf32>
    %c0_1 = arith.constant 0 : index
    %c0_2 = arith.constant 0 : index
    %c0_3 = arith.constant 0 : index
    %1 = vector.load %arg2[%c0_1, %c0_2, %c0_3] : memref<1x1x256xf32, #tpu.memory_space<vmem>>, vector<1x1x256xf32>
    %2 = vector.shape_cast %1 : vector<1x1x256xf32> to vector<1x256xf32>
    %3 = tpu.iota {dimensions = array<i32: 0>} : vector<64x1xi32>
    %c63_i32 = arith.constant 63 : i32
    %4 = vector.broadcast %c63_i32 : i32 to vector<64x1xi32>
    %5 = arith.andi %3, %4 : vector<64x1xi32>
    %c0_i32 = arith.constant 0 : i32
    %6 = vector.broadcast %c0_i32 : i32 to vector<64x1xi32>
    %7 = arith.cmpi ne, %5, %6 : vector<64x1xi32>
    %c1_i32 = arith.constant 1 : i32
    %8 = tpu.dynamic_rotate %0 by %c1_i32 dim 0 : vector<64x4xf32>, i32 -> vector<64x4xf32>
    %cst = arith.constant 0.000000e+00 : f32
    %9 = vector.shape_cast %7 : vector<64x1xi1> to vector<64x1xi1>
    %10 = vector.broadcast %9 : vector<64x1xi1> to vector<64x4xi1>
    %11 = vector.broadcast %cst : f32 to vector<64x4xf32>
    %12 = arith.select %10, %8, %11 : vector<64x4xi1>, vector<64x4xf32>
    %c63_i32_4 = arith.constant 63 : i32
    %13 = vector.broadcast %c63_i32_4 : i32 to vector<64x1xi32>
    %14 = arith.cmpi ne, %5, %13 : vector<64x1xi32>
    %c63_i32_5 = arith.constant 63 : i32
    %15 = tpu.dynamic_rotate %0 by %c63_i32_5 dim 0 : vector<64x4xf32>, i32 -> vector<64x4xf32>
    %cst_6 = arith.constant 0.000000e+00 : f32
    %16 = vector.shape_cast %14 : vector<64x1xi1> to vector<64x1xi1>
    %17 = vector.broadcast %16 : vector<64x1xi1> to vector<64x4xi1>
    %18 = vector.broadcast %cst_6 : f32 to vector<64x4xf32>
    %19 = arith.select %17, %15, %18 : vector<64x4xi1>, vector<64x4xf32>
    %20 = tpu.concatenate %12, %0, %19 in 1 : vector<64x4xf32>, vector<64x4xf32>, vector<64x4xf32> -> vector<64x12xf32>
    %c0_7 = arith.constant 0 : index
    %c0_8 = arith.constant 0 : index
    %21 = vector.load %arg3[%c0_7, %c0_8] : memref<872x128xf32, #tpu.memory_space<vmem>>, vector<12x8xf32>
    %cst_9 = arith.constant dense<0.000000e+00> : vector<64x8xf32>
    %22 = tpu.matmul %20, %21, %cst_9 {dimension_numbers = #tpu.dot_dimension_numbers<[1], [0], [0], [1], [0, 0, 1, 1], [], []>} : vector<64x12xf32>, vector<12x8xf32>, vector<64x8xf32> -> vector<64x8xf32>
    %c16 = arith.constant 16 : index
    %c0_10 = arith.constant 0 : index
    %23 = vector.load %arg3[%c16, %c0_10] : memref<872x128xf32, #tpu.memory_space<vmem>>, vector<1x8xf32>
    %24 = vector.broadcast %23 : vector<1x8xf32> to vector<64x8xf32>
    %25 = arith.addf %22, %24 : vector<64x8xf32>
    %cst_11 = arith.constant 0.000000e+00 : f32
    %26 = vector.broadcast %cst_11 : f32 to vector<64x8xf32>
    %27 = arith.maximumf %25, %26 : vector<64x8xf32>
    %c63_i32_12 = arith.constant 63 : i32
    %28 = tpu.dynamic_rotate %27 by %c63_i32_12 dim 0 : vector<64x8xf32>, i32 -> vector<64x8xf32>
    %29 = arith.maximumf %27, %28 : vector<64x8xf32>
    %c0_13 = arith.constant 0 : index
    %c0_14 = arith.constant 0 : index
    %30 = vector.load %arg5[%c0_13, %c0_14] : memref<64x32xf32, #tpu.memory_space<vmem>>, vector<64x8xf32>
    tpu.vector_store %arg5[%c0_13, %c0_14], %29 {strides = array<i32>} : memref<64x32xf32, #tpu.memory_space<vmem>>, vector<64x8xf32>,
    %c0_15 = arith.constant 0 : index
    %c0_16 = arith.constant 0 : index
    %31 = tpu.strided_load %arg5[%c0_15, %c0_16] {strides = array<i32: 2, 1>} : memref<64x32xf32, #tpu.memory_space<vmem>>, vector<32x8xf32>
    %32 = tpu.iota {dimensions = array<i32: 0>} : vector<32x1xi32>
    %c31_i32 = arith.constant 31 : i32
    %33 = vector.broadcast %c31_i32 : i32 to vector<32x1xi32>
    %34 = arith.andi %32, %33 : vector<32x1xi32>
    %c0_i32_17 = arith.constant 0 : i32
    %35 = vector.broadcast %c0_i32_17 : i32 to vector<32x1xi32>
    %36 = arith.cmpi ne, %34, %35 : vector<32x1xi32>
    %c1_i32_18 = arith.constant 1 : i32
    %37 = tpu.dynamic_rotate %31 by %c1_i32_18 dim 0 : vector<32x8xf32>, i32 -> vector<32x8xf32>
    %cst_19 = arith.constant 0.000000e+00 : f32
    %38 = vector.shape_cast %36 : vector<32x1xi1> to vector<32x1xi1>
    %39 = vector.broadcast %38 : vector<32x1xi1> to vector<32x8xi1>
    %40 = vector.broadcast %cst_19 : f32 to vector<32x8xf32>
    %41 = arith.select %39, %37, %40 : vector<32x8xi1>, vector<32x8xf32>
    %c31_i32_20 = arith.constant 31 : i32
    %42 = vector.broadcast %c31_i32_20 : i32 to vector<32x1xi32>
    %43 = arith.cmpi ne, %34, %42 : vector<32x1xi32>
    %c31_i32_21 = arith.constant 31 : i32
    %44 = tpu.dynamic_rotate %31 by %c31_i32_21 dim 0 : vector<32x8xf32>, i32 -> vector<32x8xf32>
    %cst_22 = arith.constant 0.000000e+00 : f32
    %45 = vector.shape_cast %43 : vector<32x1xi1> to vector<32x1xi1>
    %46 = vector.broadcast %45 : vector<32x1xi1> to vector<32x8xi1>
    %47 = vector.broadcast %cst_22 : f32 to vector<32x8xf32>
    %48 = arith.select %46, %44, %47 : vector<32x8xi1>, vector<32x8xf32>
    %49 = tpu.concatenate %41, %31, %48 in 1 : vector<32x8xf32>, vector<32x8xf32>, vector<32x8xf32> -> vector<32x24xf32>
    %c24 = arith.constant 24 : index
    %c0_23 = arith.constant 0 : index
    %50 = vector.load %arg3[%c24, %c0_23] : memref<872x128xf32, #tpu.memory_space<vmem>>, vector<24x16xf32>
    %cst_24 = arith.constant dense<0.000000e+00> : vector<32x16xf32>
    %51 = tpu.matmul %49, %50, %cst_24 {dimension_numbers = #tpu.dot_dimension_numbers<[1], [0], [0], [1], [0, 0, 1, 1], [], []>} : vector<32x24xf32>, vector<24x16xf32>, vector<32x16xf32> -> vector<32x16xf32>
    %c48 = arith.constant 48 : index
    %c0_25 = arith.constant 0 : index
    %52 = vector.load %arg3[%c48, %c0_25] : memref<872x128xf32, #tpu.memory_space<vmem>>, vector<1x16xf32>
    %53 = vector.broadcast %52 : vector<1x16xf32> to vector<32x16xf32>
    %54 = arith.addf %51, %53 : vector<32x16xf32>
    %cst_26 = arith.constant 0.000000e+00 : f32
    %55 = vector.broadcast %cst_26 : f32 to vector<32x16xf32>
    %56 = arith.maximumf %54, %55 : vector<32x16xf32>
    %c31_i32_27 = arith.constant 31 : i32
    %57 = tpu.dynamic_rotate %56 by %c31_i32_27 dim 0 : vector<32x16xf32>, i32 -> vector<32x16xf32>
    %58 = arith.maximumf %56, %57 : vector<32x16xf32>
    %c0_28 = arith.constant 0 : index
    %c0_29 = arith.constant 0 : index
    %59 = vector.load %arg5[%c0_28, %c0_29] : memref<64x32xf32, #tpu.memory_space<vmem>>, vector<32x16xf32>
    tpu.vector_store %arg5[%c0_28, %c0_29], %58 {strides = array<i32>} : memref<64x32xf32, #tpu.memory_space<vmem>>, vector<32x16xf32>,
    %c0_30 = arith.constant 0 : index
    %c0_31 = arith.constant 0 : index
    %60 = tpu.strided_load %arg5[%c0_30, %c0_31] {strides = array<i32: 2, 1>} : memref<64x32xf32, #tpu.memory_space<vmem>>, vector<16x16xf32>
    %61 = tpu.iota {dimensions = array<i32: 0>} : vector<16x1xi32>
    %c15_i32 = arith.constant 15 : i32
    %62 = vector.broadcast %c15_i32 : i32 to vector<16x1xi32>
    %63 = arith.andi %61, %62 : vector<16x1xi32>
    %c0_i32_32 = arith.constant 0 : i32
    %64 = vector.broadcast %c0_i32_32 : i32 to vector<16x1xi32>
    %65 = arith.cmpi ne, %63, %64 : vector<16x1xi32>
    %c1_i32_33 = arith.constant 1 : i32
    %66 = tpu.dynamic_rotate %60 by %c1_i32_33 dim 0 : vector<16x16xf32>, i32 -> vector<16x16xf32>
    %cst_34 = arith.constant 0.000000e+00 : f32
    %67 = vector.shape_cast %65 : vector<16x1xi1> to vector<16x1xi1>
    %68 = vector.broadcast %67 : vector<16x1xi1> to vector<16x16xi1>
    %69 = vector.broadcast %cst_34 : f32 to vector<16x16xf32>
    %70 = arith.select %68, %66, %69 : vector<16x16xi1>, vector<16x16xf32>
    %c15_i32_35 = arith.constant 15 : i32
    %71 = vector.broadcast %c15_i32_35 : i32 to vector<16x1xi32>
    %72 = arith.cmpi ne, %63, %71 : vector<16x1xi32>
    %c15_i32_36 = arith.constant 15 : i32
    %73 = tpu.dynamic_rotate %60 by %c15_i32_36 dim 0 : vector<16x16xf32>, i32 -> vector<16x16xf32>
    %cst_37 = arith.constant 0.000000e+00 : f32
    %74 = vector.shape_cast %72 : vector<16x1xi1> to vector<16x1xi1>
    %75 = vector.broadcast %74 : vector<16x1xi1> to vector<16x16xi1>
    %76 = vector.broadcast %cst_37 : f32 to vector<16x16xf32>
    %77 = arith.select %75, %73, %76 : vector<16x16xi1>, vector<16x16xf32>
    %78 = tpu.concatenate %70, %60, %77 in 1 : vector<16x16xf32>, vector<16x16xf32>, vector<16x16xf32> -> vector<16x48xf32>
    %c56 = arith.constant 56 : index
    %c0_38 = arith.constant 0 : index
    %79 = vector.load %arg3[%c56, %c0_38] : memref<872x128xf32, #tpu.memory_space<vmem>>, vector<48x32xf32>
    %cst_39 = arith.constant dense<0.000000e+00> : vector<16x32xf32>
    %80 = tpu.matmul %78, %79, %cst_39 {dimension_numbers = #tpu.dot_dimension_numbers<[1], [0], [0], [1], [0, 0, 1, 1], [], []>} : vector<16x48xf32>, vector<48x32xf32>, vector<16x32xf32> -> vector<16x32xf32>
    %c104 = arith.constant 104 : index
    %c0_40 = arith.constant 0 : index
    %81 = vector.load %arg3[%c104, %c0_40] : memref<872x128xf32, #tpu.memory_space<vmem>>, vector<1x32xf32>
    %82 = vector.broadcast %81 : vector<1x32xf32> to vector<16x32xf32>
    %83 = arith.addf %80, %82 : vector<16x32xf32>
    %cst_41 = arith.constant 0.000000e+00 : f32
    %84 = vector.broadcast %cst_41 : f32 to vector<16x32xf32>
    %85 = arith.maximumf %83, %84 : vector<16x32xf32>
    %c15_i32_42 = arith.constant 15 : i32
    %86 = tpu.dynamic_rotate %85 by %c15_i32_42 dim 0 : vector<16x32xf32>, i32 -> vector<16x32xf32>
    %87 = arith.maximumf %85, %86 : vector<16x32xf32>
    %c0_43 = arith.constant 0 : index
    %c0_44 = arith.constant 0 : index
    %88 = vector.load %arg5[%c0_43, %c0_44] : memref<64x32xf32, #tpu.memory_space<vmem>>, vector<16x32xf32>
    tpu.vector_store %arg5[%c0_43, %c0_44], %87 {strides = array<i32>} : memref<64x32xf32, #tpu.memory_space<vmem>>, vector<16x32xf32>,
    %c0_45 = arith.constant 0 : index
    %c0_46 = arith.constant 0 : index
    %89 = tpu.strided_load %arg5[%c0_45, %c0_46] {strides = array<i32: 2, 1>} : memref<64x32xf32, #tpu.memory_space<vmem>>, vector<8x32xf32>
    %90 = tpu.iota {dimensions = array<i32: 0>} : vector<8x1xi32>
    %c7_i32 = arith.constant 7 : i32
    %91 = vector.broadcast %c7_i32 : i32 to vector<8x1xi32>
    %92 = arith.andi %90, %91 : vector<8x1xi32>
    %c0_i32_47 = arith.constant 0 : i32
    %93 = vector.broadcast %c0_i32_47 : i32 to vector<8x1xi32>
    %94 = arith.cmpi ne, %92, %93 : vector<8x1xi32>
    %c1_i32_48 = arith.constant 1 : i32
    %95 = tpu.dynamic_rotate %89 by %c1_i32_48 dim 0 : vector<8x32xf32>, i32 -> vector<8x32xf32>
    %cst_49 = arith.constant 0.000000e+00 : f32
    %96 = vector.shape_cast %94 : vector<8x1xi1> to vector<8x1xi1>
    %97 = vector.broadcast %96 : vector<8x1xi1> to vector<8x32xi1>
    %98 = vector.broadcast %cst_49 : f32 to vector<8x32xf32>
    %99 = arith.select %97, %95, %98 : vector<8x32xi1>, vector<8x32xf32>
    %c7_i32_50 = arith.constant 7 : i32
    %100 = vector.broadcast %c7_i32_50 : i32 to vector<8x1xi32>
    %101 = arith.cmpi ne, %92, %100 : vector<8x1xi32>
    %c7_i32_51 = arith.constant 7 : i32
    %102 = tpu.dynamic_rotate %89 by %c7_i32_51 dim 0 : vector<8x32xf32>, i32 -> vector<8x32xf32>
    %cst_52 = arith.constant 0.000000e+00 : f32
    %103 = vector.shape_cast %101 : vector<8x1xi1> to vector<8x1xi1>
    %104 = vector.broadcast %103 : vector<8x1xi1> to vector<8x32xi1>
    %105 = vector.broadcast %cst_52 : f32 to vector<8x32xf32>
    %106 = arith.select %104, %102, %105 : vector<8x32xi1>, vector<8x32xf32>
    %107 = tpu.concatenate %99, %89, %106 in 1 : vector<8x32xf32>, vector<8x32xf32>, vector<8x32xf32> -> vector<8x96xf32>
    %c112 = arith.constant 112 : index
    %c0_53 = arith.constant 0 : index
    %108 = vector.load %arg3[%c112, %c0_53] : memref<872x128xf32, #tpu.memory_space<vmem>>, vector<96x32xf32>
    %cst_54 = arith.constant dense<0.000000e+00> : vector<8x32xf32>
    %109 = tpu.matmul %107, %108, %cst_54 {dimension_numbers = #tpu.dot_dimension_numbers<[1], [0], [0], [1], [0, 0, 1, 1], [], []>} : vector<8x96xf32>, vector<96x32xf32>, vector<8x32xf32> -> vector<8x32xf32>
    %c208 = arith.constant 208 : index
    %c0_55 = arith.constant 0 : index
    %110 = vector.load %arg3[%c208, %c0_55] : memref<872x128xf32, #tpu.memory_space<vmem>>, vector<1x32xf32>
    %111 = vector.broadcast %110 : vector<1x32xf32> to vector<8x32xf32>
    %112 = arith.addf %109, %111 : vector<8x32xf32>
    %cst_56 = arith.constant 0.000000e+00 : f32
    %113 = vector.broadcast %cst_56 : f32 to vector<8x32xf32>
    %114 = arith.maximumf %112, %113 : vector<8x32xf32>
    %c7_i32_57 = arith.constant 7 : i32
    %115 = tpu.dynamic_rotate %114 by %c7_i32_57 dim 0 : vector<8x32xf32>, i32 -> vector<8x32xf32>
    %116 = arith.maximumf %114, %115 : vector<8x32xf32>
    %c0_58 = arith.constant 0 : index
    %c0_59 = arith.constant 0 : index
    %117 = vector.load %arg5[%c0_58, %c0_59] : memref<64x32xf32, #tpu.memory_space<vmem>>, vector<8x32xf32>
    tpu.vector_store %arg5[%c0_58, %c0_59], %116 {strides = array<i32>} : memref<64x32xf32, #tpu.memory_space<vmem>>, vector<8x32xf32>,
    %c0_60 = arith.constant 0 : index
    %c0_61 = arith.constant 0 : index
    %118 = tpu.strided_load %arg5[%c0_60, %c0_61] {strides = array<i32: 2, 1>} : memref<64x32xf32, #tpu.memory_space<vmem>>, vector<4x32xf32>
    %119 = tpu.iota {dimensions = array<i32: 0>} : vector<4x1xi32>
    %c3_i32 = arith.constant 3 : i32
    %120 = vector.broadcast %c3_i32 : i32 to vector<4x1xi32>
    %121 = arith.andi %119, %120 : vector<4x1xi32>
    %c0_i32_62 = arith.constant 0 : i32
    %122 = vector.broadcast %c0_i32_62 : i32 to vector<4x1xi32>
    %123 = arith.cmpi ne, %121, %122 : vector<4x1xi32>
    %c1_i32_63 = arith.constant 1 : i32
    %124 = tpu.dynamic_rotate %118 by %c1_i32_63 dim 0 : vector<4x32xf32>, i32 -> vector<4x32xf32>
    %cst_64 = arith.constant 0.000000e+00 : f32
    %125 = vector.shape_cast %123 : vector<4x1xi1> to vector<4x1xi1>
    %126 = vector.broadcast %125 : vector<4x1xi1> to vector<4x32xi1>
    %127 = vector.broadcast %cst_64 : f32 to vector<4x32xf32>
    %128 = arith.select %126, %124, %127 : vector<4x32xi1>, vector<4x32xf32>
    %c3_i32_65 = arith.constant 3 : i32
    %129 = vector.broadcast %c3_i32_65 : i32 to vector<4x1xi32>
    %130 = arith.cmpi ne, %121, %129 : vector<4x1xi32>
    %c3_i32_66 = arith.constant 3 : i32
    %131 = tpu.dynamic_rotate %118 by %c3_i32_66 dim 0 : vector<4x32xf32>, i32 -> vector<4x32xf32>
    %cst_67 = arith.constant 0.000000e+00 : f32
    %132 = vector.shape_cast %130 : vector<4x1xi1> to vector<4x1xi1>
    %133 = vector.broadcast %132 : vector<4x1xi1> to vector<4x32xi1>
    %134 = vector.broadcast %cst_67 : f32 to vector<4x32xf32>
    %135 = arith.select %133, %131, %134 : vector<4x32xi1>, vector<4x32xf32>
    %136 = tpu.concatenate %128, %118, %135 in 1 : vector<4x32xf32>, vector<4x32xf32>, vector<4x32xf32> -> vector<4x96xf32>
    %c216 = arith.constant 216 : index
    %c0_68 = arith.constant 0 : index
    %137 = vector.load %arg3[%c216, %c0_68] : memref<872x128xf32, #tpu.memory_space<vmem>>, vector<96x1xf32>
    %cst_69 = arith.constant dense<0.000000e+00> : vector<4x1xf32>
    %138 = tpu.matmul %136, %137, %cst_69 {dimension_numbers = #tpu.dot_dimension_numbers<[1], [0], [0], [1], [0, 0, 1, 1], [], []>} : vector<4x96xf32>, vector<96x1xf32>, vector<4x1xf32> -> vector<4x1xf32>
    %c312 = arith.constant 312 : index
    %c0_70 = arith.constant 0 : index
    %139 = vector.load %arg3[%c312, %c0_70] : memref<872x128xf32, #tpu.memory_space<vmem>>, vector<1x1xf32>
    %140 = vector.broadcast %139 : vector<1x1xf32> to vector<4x1xf32>
    %141 = arith.addf %138, %140 : vector<4x1xf32>
    %142 = tpu.iota {dimensions = array<i32: 0>} : vector<4x4xi32>
    %143 = tpu.iota {dimensions = array<i32: 1>} : vector<4x4xi32>
    %c3_i32_71 = arith.constant 3 : i32
    %144 = vector.broadcast %c3_i32_71 : i32 to vector<4x4xi32>
    %145 = arith.andi %142, %144 : vector<4x4xi32>
    %146 = arith.cmpi eq, %145, %143 : vector<4x4xi32>
    %cst_72 = arith.constant 0.000000e+00 : f32
    %147 = vector.shape_cast %141 : vector<4x1xf32> to vector<4x1xf32>
    %148 = vector.broadcast %147 : vector<4x1xf32> to vector<4x4xf32>
    %149 = vector.broadcast %cst_72 : f32 to vector<4x4xf32>
    %150 = arith.select %146, %148, %149 : vector<4x4xi1>, vector<4x4xf32>
    %151 = tpu.iota {dimensions = array<i32: 0>} : vector<1x4xi32>
    %152 = tpu.iota {dimensions = array<i32: 1>} : vector<1x4xi32>
    %c4_i32 = arith.constant 4 : i32
    %153 = vector.broadcast %c4_i32 : i32 to vector<1x4xi32>
    %154 = arith.muli %151, %153 : vector<1x4xi32>
    %155 = arith.cmpi sge, %152, %154 : vector<1x4xi32>
    %c1_i32_73 = arith.constant 1 : i32
    %156 = vector.broadcast %c1_i32_73 : i32 to vector<1x4xi32>
    %157 = arith.addi %151, %156 : vector<1x4xi32>
    %c4_i32_74 = arith.constant 4 : i32
    %158 = vector.broadcast %c4_i32_74 : i32 to vector<1x4xi32>
    %159 = arith.muli %157, %158 : vector<1x4xi32>
    %160 = arith.cmpi slt, %152, %159 : vector<1x4xi32>
    %161 = arith.andi %155, %160 : vector<1x4xi1>
    %162 = arith.extui %161 : vector<1x4xi1> to vector<1x4xi32>
    %163 = arith.sitofp %162 : vector<1x4xi32> to vector<1x4xf32>
    %cst_75 = arith.constant dense<0.000000e+00> : vector<1x4xf32>
    %164 = tpu.matmul %163, %150, %cst_75 {dimension_numbers = #tpu.dot_dimension_numbers<[1], [0], [0], [1], [0, 0, 1, 1], [], []>} : vector<1x4xf32>, vector<4x4xf32>, vector<1x4xf32> -> vector<1x4xf32>
    %c432 = arith.constant 432 : index
    %c0_76 = arith.constant 0 : index
    %165 = vector.load %arg3[%c432, %c0_76] : memref<872x128xf32, #tpu.memory_space<vmem>>, vector<256x64xf32>
    %cst_77 = arith.constant dense<0.000000e+00> : vector<1x64xf32>
    %166 = tpu.matmul %2, %165, %cst_77 {dimension_numbers = #tpu.dot_dimension_numbers<[1], [0], [0], [1], [0, 0, 1, 1], [], []>} : vector<1x256xf32>, vector<256x64xf32>, vector<1x64xf32> -> vector<1x64xf32>
    %c688 = arith.constant 688 : index
    %c0_78 = arith.constant 0 : index
    %167 = vector.load %arg3[%c688, %c0_78] : memref<872x128xf32, #tpu.memory_space<vmem>>, vector<1x64xf32>
    %168 = arith.addf %166, %167 : vector<1x64xf32>
    %cst_79 = arith.constant 0.000000e+00 : f32
    %169 = vector.broadcast %cst_79 : f32 to vector<1x64xf32>
    %170 = arith.maximumf %168, %169 : vector<1x64xf32>
    %c696 = arith.constant 696 : index
    %c0_80 = arith.constant 0 : index
    %171 = vector.load %arg3[%c696, %c0_80] : memref<872x128xf32, #tpu.memory_space<vmem>>, vector<64x16xf32>
    %cst_81 = arith.constant dense<0.000000e+00> : vector<1x16xf32>
    %172 = tpu.matmul %170, %171, %cst_81 {dimension_numbers = #tpu.dot_dimension_numbers<[1], [0], [0], [1], [0, 0, 1, 1], [], []>} : vector<1x64xf32>, vector<64x16xf32>, vector<1x16xf32> -> vector<1x16xf32>
    %c760 = arith.constant 760 : index
    %c0_82 = arith.constant 0 : index
    %173 = vector.load %arg3[%c760, %c0_82] : memref<872x128xf32, #tpu.memory_space<vmem>>, vector<1x16xf32>
    %174 = arith.addf %172, %173 : vector<1x16xf32>
    %cst_83 = arith.constant 0.000000e+00 : f32
    %175 = vector.broadcast %cst_83 : f32 to vector<1x16xf32>
    %176 = arith.maximumf %174, %175 : vector<1x16xf32>
    %c768 = arith.constant 768 : index
    %c0_84 = arith.constant 0 : index
    %177 = vector.load %arg3[%c768, %c0_84] : memref<872x128xf32, #tpu.memory_space<vmem>>, vector<16x4xf32>
    %cst_85 = arith.constant dense<0.000000e+00> : vector<1x4xf32>
    %178 = tpu.matmul %176, %177, %cst_85 {dimension_numbers = #tpu.dot_dimension_numbers<[1], [0], [0], [1], [0, 0, 1, 1], [], []>} : vector<1x16xf32>, vector<16x4xf32>, vector<1x4xf32> -> vector<1x4xf32>
    %c784 = arith.constant 784 : index
    %c0_86 = arith.constant 0 : index
    %179 = vector.load %arg3[%c784, %c0_86] : memref<872x128xf32, #tpu.memory_space<vmem>>, vector<1x4xf32>
    %180 = arith.addf %178, %179 : vector<1x4xf32>
    %181 = tpu.iota {dimensions = array<i32: 0>} : vector<64x1xi32>
    %c63_i32_87 = arith.constant 63 : i32
    %182 = vector.broadcast %c63_i32_87 : i32 to vector<64x1xi32>
    %183 = arith.andi %181, %182 : vector<64x1xi32>
    %c0_i32_88 = arith.constant 0 : i32
    %184 = vector.broadcast %c0_i32_88 : i32 to vector<64x1xi32>
    %185 = arith.cmpi ne, %183, %184 : vector<64x1xi32>
    %c1_i32_89 = arith.constant 1 : i32
    %186 = tpu.dynamic_rotate %0 by %c1_i32_89 dim 0 : vector<64x4xf32>, i32 -> vector<64x4xf32>
    %cst_90 = arith.constant 0.000000e+00 : f32
    %187 = vector.shape_cast %185 : vector<64x1xi1> to vector<64x1xi1>
    %188 = vector.broadcast %187 : vector<64x1xi1> to vector<64x4xi1>
    %189 = vector.broadcast %cst_90 : f32 to vector<64x4xf32>
    %190 = arith.select %188, %186, %189 : vector<64x4xi1>, vector<64x4xf32>
    %c63_i32_91 = arith.constant 63 : i32
    %191 = vector.broadcast %c63_i32_91 : i32 to vector<64x1xi32>
    %192 = arith.cmpi ne, %183, %191 : vector<64x1xi32>
    %c63_i32_92 = arith.constant 63 : i32
    %193 = tpu.dynamic_rotate %0 by %c63_i32_92 dim 0 : vector<64x4xf32>, i32 -> vector<64x4xf32>
    %cst_93 = arith.constant 0.000000e+00 : f32
    %194 = vector.shape_cast %192 : vector<64x1xi1> to vector<64x1xi1>
    %195 = vector.broadcast %194 : vector<64x1xi1> to vector<64x4xi1>
    %196 = vector.broadcast %cst_93 : f32 to vector<64x4xf32>
    %197 = arith.select %195, %193, %196 : vector<64x4xi1>, vector<64x4xf32>
    %198 = tpu.concatenate %190, %0, %197 in 1 : vector<64x4xf32>, vector<64x4xf32>, vector<64x4xf32> -> vector<64x12xf32>
    %c320 = arith.constant 320 : index
    %c0_94 = arith.constant 0 : index
    %199 = vector.load %arg3[%c320, %c0_94] : memref<872x128xf32, #tpu.memory_space<vmem>>, vector<12x8xf32>
    %cst_95 = arith.constant dense<0.000000e+00> : vector<64x8xf32>
    %200 = tpu.matmul %198, %199, %cst_95 {dimension_numbers = #tpu.dot_dimension_numbers<[1], [0], [0], [1], [0, 0, 1, 1], [], []>} : vector<64x12xf32>, vector<12x8xf32>, vector<64x8xf32> -> vector<64x8xf32>
    %c336 = arith.constant 336 : index
    %c0_96 = arith.constant 0 : index
    %201 = vector.load %arg3[%c336, %c0_96] : memref<872x128xf32, #tpu.memory_space<vmem>>, vector<1x8xf32>
    %202 = vector.broadcast %201 : vector<1x8xf32> to vector<64x8xf32>
    %203 = arith.addf %200, %202 : vector<64x8xf32>
    %cst_97 = arith.constant 0.000000e+00 : f32
    %204 = vector.broadcast %cst_97 : f32 to vector<64x8xf32>
    %205 = arith.maximumf %203, %204 : vector<64x8xf32>
    %c63_i32_98 = arith.constant 63 : i32
    %206 = tpu.dynamic_rotate %205 by %c63_i32_98 dim 0 : vector<64x8xf32>, i32 -> vector<64x8xf32>
    %207 = arith.maximumf %205, %206 : vector<64x8xf32>
    %c0_99 = arith.constant 0 : index
    %c0_100 = arith.constant 0 : index
    %208 = vector.load %arg5[%c0_99, %c0_100] : memref<64x32xf32, #tpu.memory_space<vmem>>, vector<64x8xf32>
    tpu.vector_store %arg5[%c0_99, %c0_100], %207 {strides = array<i32>} : memref<64x32xf32, #tpu.memory_space<vmem>>, vector<64x8xf32>,
    %c0_101 = arith.constant 0 : index
    %c0_102 = arith.constant 0 : index
    %209 = tpu.strided_load %arg5[%c0_101, %c0_102] {strides = array<i32: 2, 1>} : memref<64x32xf32, #tpu.memory_space<vmem>>, vector<32x8xf32>
    %210 = tpu.iota {dimensions = array<i32: 0>} : vector<32x1xi32>
    %c31_i32_103 = arith.constant 31 : i32
    %211 = vector.broadcast %c31_i32_103 : i32 to vector<32x1xi32>
    %212 = arith.andi %210, %211 : vector<32x1xi32>
    %c0_i32_104 = arith.constant 0 : i32
    %213 = vector.broadcast %c0_i32_104 : i32 to vector<32x1xi32>
    %214 = arith.cmpi ne, %212, %213 : vector<32x1xi32>
    %c1_i32_105 = arith.constant 1 : i32
    %215 = tpu.dynamic_rotate %209 by %c1_i32_105 dim 0 : vector<32x8xf32>, i32 -> vector<32x8xf32>
    %cst_106 = arith.constant 0.000000e+00 : f32
    %216 = vector.shape_cast %214 : vector<32x1xi1> to vector<32x1xi1>
    %217 = vector.broadcast %216 : vector<32x1xi1> to vector<32x8xi1>
    %218 = vector.broadcast %cst_106 : f32 to vector<32x8xf32>
    %219 = arith.select %217, %215, %218 : vector<32x8xi1>, vector<32x8xf32>
    %c31_i32_107 = arith.constant 31 : i32
    %220 = vector.broadcast %c31_i32_107 : i32 to vector<32x1xi32>
    %221 = arith.cmpi ne, %212, %220 : vector<32x1xi32>
    %c31_i32_108 = arith.constant 31 : i32
    %222 = tpu.dynamic_rotate %209 by %c31_i32_108 dim 0 : vector<32x8xf32>, i32 -> vector<32x8xf32>
    %cst_109 = arith.constant 0.000000e+00 : f32
    %223 = vector.shape_cast %221 : vector<32x1xi1> to vector<32x1xi1>
    %224 = vector.broadcast %223 : vector<32x1xi1> to vector<32x8xi1>
    %225 = vector.broadcast %cst_109 : f32 to vector<32x8xf32>
    %226 = arith.select %224, %222, %225 : vector<32x8xi1>, vector<32x8xf32>
    %227 = tpu.concatenate %219, %209, %226 in 1 : vector<32x8xf32>, vector<32x8xf32>, vector<32x8xf32> -> vector<32x24xf32>
    %c344 = arith.constant 344 : index
    %c0_110 = arith.constant 0 : index
    %228 = vector.load %arg3[%c344, %c0_110] : memref<872x128xf32, #tpu.memory_space<vmem>>, vector<24x16xf32>
    %cst_111 = arith.constant dense<0.000000e+00> : vector<32x16xf32>
    %229 = tpu.matmul %227, %228, %cst_111 {dimension_numbers = #tpu.dot_dimension_numbers<[1], [0], [0], [1], [0, 0, 1, 1], [], []>} : vector<32x24xf32>, vector<24x16xf32>, vector<32x16xf32> -> vector<32x16xf32>
    %c368 = arith.constant 368 : index
    %c0_112 = arith.constant 0 : index
    %230 = vector.load %arg3[%c368, %c0_112] : memref<872x128xf32, #tpu.memory_space<vmem>>, vector<1x16xf32>
    %231 = vector.broadcast %230 : vector<1x16xf32> to vector<32x16xf32>
    %232 = arith.addf %229, %231 : vector<32x16xf32>
    %cst_113 = arith.constant 0.000000e+00 : f32
    %233 = vector.broadcast %cst_113 : f32 to vector<32x16xf32>
    %234 = arith.maximumf %232, %233 : vector<32x16xf32>
    %c31_i32_114 = arith.constant 31 : i32
    %235 = tpu.dynamic_rotate %234 by %c31_i32_114 dim 0 : vector<32x16xf32>, i32 -> vector<32x16xf32>
    %236 = arith.maximumf %234, %235 : vector<32x16xf32>
    %c0_115 = arith.constant 0 : index
    %c0_116 = arith.constant 0 : index
    %237 = vector.load %arg5[%c0_115, %c0_116] : memref<64x32xf32, #tpu.memory_space<vmem>>, vector<32x16xf32>
    tpu.vector_store %arg5[%c0_115, %c0_116], %236 {strides = array<i32>} : memref<64x32xf32, #tpu.memory_space<vmem>>, vector<32x16xf32>,
    %c0_117 = arith.constant 0 : index
    %c0_118 = arith.constant 0 : index
    %238 = tpu.strided_load %arg5[%c0_117, %c0_118] {strides = array<i32: 2, 1>} : memref<64x32xf32, #tpu.memory_space<vmem>>, vector<16x16xf32>
    %239 = tpu.iota {dimensions = array<i32: 0>} : vector<16x1xi32>
    %c15_i32_119 = arith.constant 15 : i32
    %240 = vector.broadcast %c15_i32_119 : i32 to vector<16x1xi32>
    %241 = arith.andi %239, %240 : vector<16x1xi32>
    %c0_i32_120 = arith.constant 0 : i32
    %242 = vector.broadcast %c0_i32_120 : i32 to vector<16x1xi32>
    %243 = arith.cmpi ne, %241, %242 : vector<16x1xi32>
    %c1_i32_121 = arith.constant 1 : i32
    %244 = tpu.dynamic_rotate %238 by %c1_i32_121 dim 0 : vector<16x16xf32>, i32 -> vector<16x16xf32>
    %cst_122 = arith.constant 0.000000e+00 : f32
    %245 = vector.shape_cast %243 : vector<16x1xi1> to vector<16x1xi1>
    %246 = vector.broadcast %245 : vector<16x1xi1> to vector<16x16xi1>
    %247 = vector.broadcast %cst_122 : f32 to vector<16x16xf32>
    %248 = arith.select %246, %244, %247 : vector<16x16xi1>, vector<16x16xf32>
    %c15_i32_123 = arith.constant 15 : i32
    %249 = vector.broadcast %c15_i32_123 : i32 to vector<16x1xi32>
    %250 = arith.cmpi ne, %241, %249 : vector<16x1xi32>
    %c15_i32_124 = arith.constant 15 : i32
    %251 = tpu.dynamic_rotate %238 by %c15_i32_124 dim 0 : vector<16x16xf32>, i32 -> vector<16x16xf32>
    %cst_125 = arith.constant 0.000000e+00 : f32
    %252 = vector.shape_cast %250 : vector<16x1xi1> to vector<16x1xi1>
    %253 = vector.broadcast %252 : vector<16x1xi1> to vector<16x16xi1>
    %254 = vector.broadcast %cst_125 : f32 to vector<16x16xf32>
    %255 = arith.select %253, %251, %254 : vector<16x16xi1>, vector<16x16xf32>
    %256 = tpu.concatenate %248, %238, %255 in 1 : vector<16x16xf32>, vector<16x16xf32>, vector<16x16xf32> -> vector<16x48xf32>
    %c376 = arith.constant 376 : index
    %c0_126 = arith.constant 0 : index
    %257 = vector.load %arg3[%c376, %c0_126] : memref<872x128xf32, #tpu.memory_space<vmem>>, vector<48x1xf32>
    %cst_127 = arith.constant dense<0.000000e+00> : vector<16x1xf32>
    %258 = tpu.matmul %256, %257, %cst_127 {dimension_numbers = #tpu.dot_dimension_numbers<[1], [0], [0], [1], [0, 0, 1, 1], [], []>} : vector<16x48xf32>, vector<48x1xf32>, vector<16x1xf32> -> vector<16x1xf32>
    %c424 = arith.constant 424 : index
    %c0_128 = arith.constant 0 : index
    %259 = vector.load %arg3[%c424, %c0_128] : memref<872x128xf32, #tpu.memory_space<vmem>>, vector<1x1xf32>
    %260 = vector.broadcast %259 : vector<1x1xf32> to vector<16x1xf32>
    %261 = arith.addf %258, %260 : vector<16x1xf32>
    %262 = tpu.iota {dimensions = array<i32: 0>} : vector<16x16xi32>
    %263 = tpu.iota {dimensions = array<i32: 1>} : vector<16x16xi32>
    %c15_i32_129 = arith.constant 15 : i32
    %264 = vector.broadcast %c15_i32_129 : i32 to vector<16x16xi32>
    %265 = arith.andi %262, %264 : vector<16x16xi32>
    %266 = arith.cmpi eq, %265, %263 : vector<16x16xi32>
    %cst_130 = arith.constant 0.000000e+00 : f32
    %267 = vector.shape_cast %261 : vector<16x1xf32> to vector<16x1xf32>
    %268 = vector.broadcast %267 : vector<16x1xf32> to vector<16x16xf32>
    %269 = vector.broadcast %cst_130 : f32 to vector<16x16xf32>
    %270 = arith.select %266, %268, %269 : vector<16x16xi1>, vector<16x16xf32>
    %271 = tpu.iota {dimensions = array<i32: 0>} : vector<1x16xi32>
    %272 = tpu.iota {dimensions = array<i32: 1>} : vector<1x16xi32>
    %c16_i32 = arith.constant 16 : i32
    %273 = vector.broadcast %c16_i32 : i32 to vector<1x16xi32>
    %274 = arith.muli %271, %273 : vector<1x16xi32>
    %275 = arith.cmpi sge, %272, %274 : vector<1x16xi32>
    %c1_i32_131 = arith.constant 1 : i32
    %276 = vector.broadcast %c1_i32_131 : i32 to vector<1x16xi32>
    %277 = arith.addi %271, %276 : vector<1x16xi32>
    %c16_i32_132 = arith.constant 16 : i32
    %278 = vector.broadcast %c16_i32_132 : i32 to vector<1x16xi32>
    %279 = arith.muli %277, %278 : vector<1x16xi32>
    %280 = arith.cmpi slt, %272, %279 : vector<1x16xi32>
    %281 = arith.andi %275, %280 : vector<1x16xi1>
    %282 = arith.extui %281 : vector<1x16xi1> to vector<1x16xi32>
    %283 = arith.sitofp %282 : vector<1x16xi32> to vector<1x16xf32>
    %cst_133 = arith.constant dense<0.000000e+00> : vector<1x16xf32>
    %284 = tpu.matmul %283, %270, %cst_133 {dimension_numbers = #tpu.dot_dimension_numbers<[1], [0], [0], [1], [0, 0, 1, 1], [], []>} : vector<1x16xf32>, vector<16x16xf32>, vector<1x16xf32> -> vector<1x16xf32>
    %c792 = arith.constant 792 : index
    %c0_134 = arith.constant 0 : index
    %285 = vector.load %arg3[%c792, %c0_134] : memref<872x128xf32, #tpu.memory_space<vmem>>, vector<16x32xf32>
    %cst_135 = arith.constant dense<0.000000e+00> : vector<1x32xf32>
    %286 = tpu.matmul %284, %285, %cst_135 {dimension_numbers = #tpu.dot_dimension_numbers<[1], [0], [0], [1], [0, 0, 1, 1], [], []>} : vector<1x16xf32>, vector<16x32xf32>, vector<1x32xf32> -> vector<1x32xf32>
    %c808 = arith.constant 808 : index
    %c0_136 = arith.constant 0 : index
    %287 = vector.load %arg3[%c808, %c0_136] : memref<872x128xf32, #tpu.memory_space<vmem>>, vector<1x32xf32>
    %288 = arith.addf %286, %287 : vector<1x32xf32>
    %cst_137 = arith.constant 0.000000e+00 : f32
    %289 = vector.broadcast %cst_137 : f32 to vector<1x32xf32>
    %290 = arith.maximumf %288, %289 : vector<1x32xf32>
    %c816 = arith.constant 816 : index
    %c0_138 = arith.constant 0 : index
    %291 = vector.load %arg3[%c816, %c0_138] : memref<872x128xf32, #tpu.memory_space<vmem>>, vector<32x4xf32>
    %cst_139 = arith.constant dense<0.000000e+00> : vector<1x4xf32>
    %292 = tpu.matmul %290, %291, %cst_139 {dimension_numbers = #tpu.dot_dimension_numbers<[1], [0], [0], [1], [0, 0, 1, 1], [], []>} : vector<1x32xf32>, vector<32x4xf32>, vector<1x4xf32> -> vector<1x4xf32>
    %c848 = arith.constant 848 : index
    %c0_140 = arith.constant 0 : index
    %293 = vector.load %arg3[%c848, %c0_140] : memref<872x128xf32, #tpu.memory_space<vmem>>, vector<1x4xf32>
    %294 = arith.addf %292, %293 : vector<1x4xf32>
    %295 = arith.addf %164, %180 : vector<1x4xf32>
    %296 = arith.addf %295, %294 : vector<1x4xf32>
    %c856 = arith.constant 856 : index
    %c0_141 = arith.constant 0 : index
    %297 = vector.load %arg3[%c856, %c0_141] : memref<872x128xf32, #tpu.memory_space<vmem>>, vector<4x128xf32>
    %c864 = arith.constant 864 : index
    %c0_142 = arith.constant 0 : index
    %298 = vector.load %arg3[%c864, %c0_142] : memref<872x128xf32, #tpu.memory_space<vmem>>, vector<1x128xf32>
    %cst_143 = arith.constant dense<0.000000e+00> : vector<1x128xf32>
    %299 = tpu.matmul %296, %297, %cst_143 {dimension_numbers = #tpu.dot_dimension_numbers<[1], [0], [0], [1], [0, 0, 1, 1], [], []>} : vector<1x4xf32>, vector<4x128xf32>, vector<1x128xf32> -> vector<1x128xf32>
    %300 = arith.addf %299, %298 : vector<1x128xf32>
    %c0_144 = arith.constant 0 : index
    %c0_145 = arith.constant 0 : index
    %c0_146 = arith.constant 0 : index
    %301 = vector.load %arg4[%c0_144, %c0_145, %c0_146] : memref<1x1x128xf32, #tpu.memory_space<vmem>>, vector<1x1x128xf32>
    %302 = vector.shape_cast %301 : vector<1x1x128xf32> to vector<1x128xf32>
    %303 = vector.shape_cast %300 : vector<1x128xf32> to vector<1x1x128xf32>
    tpu.vector_store %arg4[%c0_144, %c0_145, %c0_146], %303 {strides = array<i32>} : memref<1x1x128xf32, #tpu.memory_space<vmem>>, vector<1x1x128xf32>,
    return
  }
  func.func @transform_0(%arg0: i32) -> (i32, i32) {
    %c0_i32 = arith.constant 0 : i32
    %c0_i32_0 = arith.constant 0 : i32
    return %arg0, %c0_i32 : i32, i32
  }
  func.func @transform_1(%arg0: i32) -> (i32, i32, i32) {
    %c0_i32 = arith.constant 0 : i32
    %c0_i32_0 = arith.constant 0 : i32
    %c0_i32_1 = arith.constant 0 : i32
    return %arg0, %c0_i32, %c0_i32_0 : i32, i32, i32
  }
  func.func @transform_2(%arg0: i32) -> (i32, i32) {
    %c0_i32 = arith.constant 0 : i32
    %c0_i32_0 = arith.constant 0 : i32
    %c0_i32_1 = arith.constant 0 : i32
    return %c0_i32, %c0_i32_0 : i32, i32
  }
  func.func @transform_3(%arg0: i32) -> (i32, i32, i32) {
    %c0_i32 = arith.constant 0 : i32
    %c0_i32_0 = arith.constant 0 : i32
    %c0_i32_1 = arith.constant 0 : i32
    return %arg0, %c0_i32, %c0_i32_0 : i32, i32, i32
  }
}

</mosaic_0001>

<llo_original>
// kernel: tpu_custom_call.1
$region0: #{tpu_custom_call.1}
  #allocation0 [shape = 'u32[]', space=smem, size = 0x4, offset = 0x4, fixed_abs, tag = 'smem constant byte address 0x4 - core index']
  #allocation1 [shape = 'u32[144,128]{1,0:T(1,128)}', space=vmem, size = 0x12000, scoped, tag = 'internal scratch']
  #allocation2 [shape = 'f32[64,32]{1,0:T(8,128)}', space=vmem, size = 0x8000, scoped, tag = 'scratch operand']
  %s0 = inlined_call_operand.vmem [shape: f32[128,4], index: 0, kind: input, shape index: {}]
  %s1 = inlined_call_operand.vmem [shape: f32[2,1,256], index: 1, kind: input, shape index: {}]
  %s2 = inlined_call_operand.hbm [shape: f32[872,128], index: 2, kind: input, shape index: {}]
  %s3 = inlined_call_operand.hbm [shape: f32[2,1,128], index: 3, kind: output, shape index: {}]
  %s4 = sld [smem:[#allocation0]]
  $region49: #{tpu_custom_call.1} parent=0
    _
  %s6 = ssub.s32 1, %s4
  %s7 = scalar_select 0, %s6, %s4
  $region1: #{tpu_custom_call.1} parent=0
    #allocation3 [shape = 'u8[446464]{0}', space=vmem, size = 0x6d000, scoped, tag = 'input window, operand 2, single buffered']
    #allocation4 [shape = 's32[2]{0}', space=sflag, size = 0x8, scoped, tag = 'scoped memory for tpu_custom_call.1']
    #allocation5 [shape = 's32[2]{0}', space=sflag, size = 0x8, scoped, tag = 'scoped memory for tpu_custom_call.1']
    #allocation6 [shape = 'u8[1024]{0}', space=vmem, size = 0x400, scoped, tag = 'output window, operand 0']
    %8 = vsyncpa [#allocation4], 0
    %9 = vsyncpa [#allocation5], 0
    %s10 = scalar_lea.sflag [#allocation5], 1
    %11 = vsyncpa %s10, 0
    loop: start=0, step=1, limit=4
    $region2: #{tpu_custom_call.1} parent=1 // loop_pre_header
      _
    $region3: #{tpu_custom_call.1} parent=1 // loop_header
      %s13 = sphi 0, %s17
      %p14 = scmp.ge.s32.totalorder %s13, 4
      %s23 = sphi 0, %s25
      %s26 = sphi 0, %s23
      %s27 = sphi 0, %s26
      %s43 = sphi 0, %s27
      %s49 = sphi 0, %s51
      %s52 = sphi 0, %s49
      %s53 = sphi 0, %s52
      %s69 = sphi 0, %s53
      %s73 = sphi 0, %s73
      %s75 = sphi 0, %s73
      %s76 = sphi 0, %s75
      %s90 = sphi 0, %s76
      %s96 = sphi 0, %s98
      %s99 = sphi 0, %s96
      %s100 = sphi 0, %s99
      %s116 = sphi 0, %s100
    $region4: #{tpu_custom_call.1} parent=1 // loop_header_branch
      %16 = sbr.rel (%p14) target = $region8
    $region5: #{tpu_custom_call.1} parent=1 // loop_body
      %s18 = ssub.s32 %s13, 1
      %s19 = ssub.s32 %s13, 2
      %s20 = sadd.s32 %s13, 1
      %s21 = ssub.s32 %s13, %s20
      %p22 = scmp.eq.s32.totalorder %s21, 0
      %s24 = sadd.s32 %s23, 1
      %s25 = scalar_select %p22, %s23, %s24
      %p28 = pneg %p22
      %p29 = scmp.eq.s32.totalorder %s13, 1
      %p30 = por %p28, %p29
      %p31 = scmp.ne.s32.totalorder %s23, %s26
      %p32 = scmp.eq.s32.totalorder %s13, 0
      %p33 = por %p31, %p32
      %p34 = scmp.ne.s32.totalorder %s23, %s26
      %p35 = scmp.eq.s32.totalorder %s18, 1
      %p36 = por %p34, %p35
      %p37 = scmp.ne.s32.totalorder %s26, %s27
      %p38 = scmp.eq.s32.totalorder %s18, 0
      %p39 = por %p37, %p38
      %p40 = scmp.ne.s32.totalorder %s26, %s27
      %p41 = scmp.eq.s32.totalorder %s19, 1
      %p42 = por %p40, %p41
      %p44 = scmp.ne.s32.totalorder %s27, %s43
      %p45 = scmp.eq.s32.totalorder %s19, 0
      %p46 = por %p44, %p45
      %s47 = ssub.s32 %s13, %s20
      %p48 = scmp.eq.s32.totalorder %s47, 0
      %s50 = sadd.s32 %s49, 1
      %s51 = scalar_select %p48, %s49, %s50
      %p54 = pneg %p48
      %p55 = scmp.eq.s32.totalorder %s13, 1
      %p56 = por %p54, %p55
      %p57 = scmp.ne.s32.totalorder %s49, %s52
      %p58 = scmp.eq.s32.totalorder %s13, 0
      %p59 = por %p57, %p58
      %p60 = scmp.ne.s32.totalorder %s49, %s52
      %p61 = scmp.eq.s32.totalorder %s18, 1
      %p62 = por %p60, %p61
      %p63 = scmp.ne.s32.totalorder %s52, %s53
      %p64 = scmp.eq.s32.totalorder %s18, 0
      %p65 = por %p63, %p64
      %p66 = scmp.ne.s32.totalorder %s52, %s53
      %p67 = scmp.eq.s32.totalorder %s19, 1
      %p68 = por %p66, %p67
      %p70 = scmp.ne.s32.totalorder %s53, %s69
      %p71 = scmp.eq.s32.totalorder %s19, 0
      %p72 = por %p70, %p71
      %s74 = sadd.s32 %s73, 1
      %p77 = scmp.eq.s32.totalorder %s13, 1
      %p78 = scmp.ne.s32.totalorder %s73, %s75
      %p79 = scmp.eq.s32.totalorder %s13, 0
      %p80 = por %p78, %p79
      %p81 = scmp.ne.s32.totalorder %s73, %s75
      %p82 = scmp.eq.s32.totalorder %s18, 1
      %p83 = por %p81, %p82
      %p84 = scmp.ne.s32.totalorder %s75, %s76
      %p85 = scmp.eq.s32.totalorder %s18, 0
      %p86 = por %p84, %p85
      %p87 = scmp.ne.s32.totalorder %s75, %s76
      %p88 = scmp.eq.s32.totalorder %s19, 1
      %p89 = por %p87, %p88
      %p91 = scmp.ne.s32.totalorder %s76, %s90
      %p92 = scmp.eq.s32.totalorder %s19, 0
      %p93 = por %p91, %p92
      %s94 = ssub.s32 %s13, %s20
      %p95 = scmp.eq.s32.totalorder %s94, 0
      %s97 = sadd.s32 %s96, 1
      %s98 = scalar_select %p95, %s96, %s97
      %p101 = pneg %p95
      %p102 = scmp.eq.s32.totalorder %s13, 1
      %p103 = por %p101, %p102
      %p104 = scmp.ne.s32.totalorder %s96, %s99
      %p105 = scmp.eq.s32.totalorder %s13, 0
      %p106 = por %p104, %p105
      %p107 = scmp.ne.s32.totalorder %s96, %s99
      %p108 = scmp.eq.s32.totalorder %s18, 1
      %p109 = por %p107, %p108
      %p110 = scmp.ne.s32.totalorder %s99, %s100
      %p111 = scmp.eq.s32.totalorder %s18, 0
      %p112 = por %p110, %p111
      %p113 = scmp.ne.s32.totalorder %s99, %s100
      %p114 = scmp.eq.s32.totalorder %s19, 1
      %p115 = por %p113, %p114
      %p117 = scmp.ne.s32.totalorder %s100, %s116
      %p118 = scmp.eq.s32.totalorder %s19, 0
      %p119 = por %p117, %p118
      %p120 = scmp.le.s32.totalorder 1, %s13
      %p121 = scmp.lt.s32.totalorder %s13, 3
      %p122 = pnand %p120, %p121
      %p123 = pneg %p122
      // Predicated region
      $region9: #{tpu_custom_call.1} parent=5 // pred_check
        _
      $region10: #{tpu_custom_call.1} parent=5 // pred_check_branch
        %125 = sbr.rel (%p122) target = $region12
      $region11: #{tpu_custom_call.1} parent=5 // pred_region
        %s126 = ssub.s32 %s13, 1
        // Predicated region
        $region13: #{tpu_custom_call.1} parent=11 // pred_check
          %p127 = pneg %p86
        $region14: #{tpu_custom_call.1} parent=11 // pred_check_branch
          %129 = sbr.rel (%p127) target = $region16
        $region15: #{tpu_custom_call.1} parent=11 // pred_region
          %s131 = ssub.s32 13952, 13952
          %132 = vsyncadd [#allocation4], %s131
          %s133 = sshll.u32 [#allocation3], 4
          %s134 = int_to_ptr.vmem [resolvable:$true] %s133
          %139 = dma.hbm_to_vmem [thread:$0]  %s2, 13952, %s134, [#allocation4], 128, 128, 8
        $region16: #{tpu_custom_call.1} parent=11 // pred_fallthru
          _
      $region12: #{tpu_custom_call.1} parent=5 // pred_fallthru
        _
      %p140 = scmp.lt.s32.totalorder %s13, 2
      // Predicated region
      $region17: #{tpu_custom_call.1} parent=5 // pred_check
        %p141 = pneg %p140
      $region18: #{tpu_custom_call.1} parent=5 // pred_check_branch
        %143 = sbr.rel (%p141) target = $region20
      $region19: #{tpu_custom_call.1} parent=5 // pred_region
        // Predicated region
        $region21: #{tpu_custom_call.1} parent=19 // pred_check
          %p144 = pneg %p33
        $region22: #{tpu_custom_call.1} parent=19 // pred_check_branch
          %146 = sbr.rel (%p144) target = $region24
        $region23: #{tpu_custom_call.1} parent=19 // pred_region
          %s147 = smul.u32 8, %s13
          %p148 = scmp.lt.s32.totalorder %s147, 15
          %s149 = scalar_select %p148, %s147, 15
          %s150 = smul.addr %s149, 8
          %s151 = scalar_lea.vmem %s0, %s150
          %s152 = smul.u32 8, %s13
        $region24: #{tpu_custom_call.1} parent=19 // pred_fallthru
          _
        // Predicated region
        $region25: #{tpu_custom_call.1} parent=19 // pred_check
          %p153 = pneg %p59
        $region26: #{tpu_custom_call.1} parent=19 // pred_check_branch
          %155 = sbr.rel (%p153) target = $region28
        $region27: #{tpu_custom_call.1} parent=19 // pred_region
          %p156 = scmp.lt.s32.totalorder %s13, 1
          %s157 = scalar_select %p156, %s13, 1
          %s158 = smul.addr %s157, 2
          %s159 = scalar_lea.vmem %s1, %s158
        $region28: #{tpu_custom_call.1} parent=19 // pred_fallthru
          _
      $region20: #{tpu_custom_call.1} parent=5 // pred_fallthru
        _
      %p160 = scmp.le.s32.totalorder 1, %s13
      %p161 = scmp.lt.s32.totalorder %s13, 3
      %p162 = pnand %p160, %p161
      %p163 = pneg %p162
      // Predicated region
      $region29: #{tpu_custom_call.1} parent=5 // pred_check
        _
      $region30: #{tpu_custom_call.1} parent=5 // pred_check_branch
        %165 = sbr.rel (%p162) target = $region32
      $region31: #{tpu_custom_call.1} parent=5 // pred_region
        %s166 = ssub.s32 %s13, 1
        // Predicated region
        $region33: #{tpu_custom_call.1} parent=31 // pred_check
          %p167 = pneg %p86
        $region34: #{tpu_custom_call.1} parent=31 // pred_check_branch
          %169 = sbr.rel (%p167) target = $region36
        $region35: #{tpu_custom_call.1} parent=31 // pred_region
          %170 = dma.done [#allocation4], 13952
        $region36: #{tpu_custom_call.1} parent=31 // pred_fallthru
          _
        %s171 = smul.u32 8, %s18
        %p172 = scmp.lt.s32.totalorder %s171, 15
        %s173 = scalar_select %p172, %s171, 15
        %s174 = smul.addr %s173, 8
        %s175 = scalar_lea.vmem %s0, %s174
        %p176 = pneg %p39
        %p177 = pneg %p36
        %p178 = scmp.lt.s32.totalorder %s18, 1
        %s179 = scalar_select %p178, %s18, 1
        %s180 = smul.addr %s179, 2
        %s181 = scalar_lea.vmem %s1, %s180
        %p182 = pneg %p65
        %p183 = pneg %p62
        %p184 = pneg %p86
        %p185 = pneg %p83
        %p186 = pneg %p112
        %p187 = pneg %p109
        %s188 = sand.u32 %s99, 1
        %s189 = scalar_lea.sflag [#allocation5], %s188
        %s190 = sand.u32 %s99, 1
        %s191 = scalar_lea.vmem [#allocation6], %s190
        %s192 = smul.u32 8, %s18
        %p193 = scmp.lt.s32.totalorder %s192, 15
        %s194 = scalar_select %p193, %s192, 15
        %s195 = smul.addr %s194, 8
        %s196 = scalar_lea.vmem %s0, %s195
        %s197 = smul.u32 8, %s18
        %p198 = scmp.lt.s32.totalorder %s18, 1
        %s199 = scalar_select %p198, %s18, 1
        %s200 = smul.addr %s199, 2
        %s201 = scalar_lea.vmem %s1, %s200
        %v202 = vld [vmem:[%s196] sm:$0xff]
        %v203 = vld [vmem:[%s196 + $0x8] sm:$0xff]
        %v204 = vld [vmem:[%s196 + $0x10] sm:$0xff]
        %v205 = vld [vmem:[%s196 + $0x18] sm:$0xff]
        %v206 = vld [vmem:[%s196 + $0x20] sm:$0xff]
        %v207 = vld [vmem:[%s196 + $0x28] sm:$0xff]
        %v208 = vld [vmem:[%s196 + $0x30] sm:$0xff]
        %v209 = vld [vmem:[%s196 + $0x38] sm:$0xff]
        %v210 = vld [vmem:[%s201] sm:$0x3]
        %v211 = vlaneseq
        %v212 = vshrl.u32 %v211, 7
        %v213 = vadd.s32 %v212, 8
        %v214 = vadd.s32 %v212, 16
        %v215 = vadd.s32 %v212, 24
        %v216 = vadd.s32 %v212, 32
        %v217 = vadd.s32 %v212, 40
        %v218 = vadd.s32 %v212, 48
        %v219 = vadd.s32 %v212, 56
        %v220 = vand.u32 %v212, 63
        %v221 = vand.u32 %v213, 63
        %v222 = vand.u32 %v214, 63
        %v223 = vand.u32 %v215, 63
        %v224 = vand.u32 %v216, 63
        %v225 = vand.u32 %v217, 63
        %v226 = vand.u32 %v218, 63
        %v227 = vand.u32 %v219, 63
        %vm228 = vcmp.ne.s32.totalorder %v220, 0
        %vm229 = vcmp.ne.s32.totalorder %v221, 0
        %vm230 = vcmp.ne.s32.totalorder %v222, 0
        %vm231 = vcmp.ne.s32.totalorder %v223, 0
        %vm232 = vcmp.ne.s32.totalorder %v224, 0
        %vm233 = vcmp.ne.s32.totalorder %v225, 0
        %vm234 = vcmp.ne.s32.totalorder %v226, 0
        %vm235 = vcmp.ne.s32.totalorder %v227, 0
        %v236 = vrot.slane %v202, 7
        %v237 = vrot.slane %v203, 7
        %v238 = vrot.slane %v204, 7
        %v239 = vrot.slane %v205, 7
        %v240 = vrot.slane %v206, 7
        %v241 = vrot.slane %v207, 7
        %v242 = vrot.slane %v208, 7
        %v243 = vrot.slane %v209, 7
        %vm244 = vcmp.lt.s32.totalorder %v212, 1
        %v245 = vsel %vm244, %v242, %v243
        %v246 = vsel %vm244, %v241, %v242
        %v247 = vsel %vm244, %v240, %v241
        %v248 = vsel %vm244, %v239, %v240
        %v249 = vsel %vm244, %v238, %v239
        %v250 = vsel %vm244, %v237, %v238
        %v251 = vsel %vm244, %v236, %v237
        %v252 = vsel %vm244, %v243, %v236
        %v253 = vsel %vm228, 1, 0
        %v254 = vsel %vm229, 1, 0
        %v255 = vsel %vm230, 1, 0
        %v256 = vsel %vm231, 1, 0
        %v257 = vsel %vm232, 1, 0
        %v258 = vsel %vm233, 1, 0
        %v259 = vsel %vm234, 1, 0
        %v260 = vsel %vm235, 1, 0
        %vm261 = vcmp.eq.s32.totalorder %v253, 1
        %vm262 = vcmp.eq.s32.totalorder %v254, 1
        %vm263 = vcmp.eq.s32.totalorder %v255, 1
        %vm264 = vcmp.eq.s32.totalorder %v256, 1
        %vm265 = vcmp.eq.s32.totalorder %v257, 1
        %vm266 = vcmp.eq.s32.totalorder %v258, 1
        %vm267 = vcmp.eq.s32.totalorder %v259, 1
        %vm268 = vcmp.eq.s32.totalorder %v260, 1
        %v269 = vsel %vm261, %v252, 0.0
        %v270 = vsel %vm262, %v251, 0.0
        %v271 = vsel %vm263, %v250, 0.0
        %v272 = vsel %vm264, %v249, 0.0
        %v273 = vsel %vm265, %v248, 0.0
        %v274 = vsel %vm266, %v247, 0.0
        %v275 = vsel %vm267, %v246, 0.0
        %v276 = vsel %vm268, %v245, 0.0
        %vm277 = vcmp.ne.s32.totalorder %v220, 63
        %vm278 = vcmp.ne.s32.totalorder %v221, 63
        %vm279 = vcmp.ne.s32.totalorder %v222, 63
        %vm280 = vcmp.ne.s32.totalorder %v223, 63
        %vm281 = vcmp.ne.s32.totalorder %v224, 63
        %vm282 = vcmp.ne.s32.totalorder %v225, 63
        %vm283 = vcmp.ne.s32.totalorder %v226, 63
        %vm284 = vcmp.ne.s32.totalorder %v227, 63
        %v285 = vrot.slane %v202, 1
        %v286 = vrot.slane %v203, 1
        %v287 = vrot.slane %v204, 1
        %v288 = vrot.slane %v205, 1
        %v289 = vrot.slane %v206, 1
        %v290 = vrot.slane %v207, 1
        %v291 = vrot.slane %v208, 1
        %v292 = vrot.slane %v209, 1
        %vm293 = vcmp.lt.s32.totalorder %v212, 7
        %v294 = vsel %vm293, %v291, %v292
        %v295 = vsel %vm293, %v290, %v291
        %v296 = vsel %vm293, %v289, %v290
        %v297 = vsel %vm293, %v288, %v289
        %v298 = vsel %vm293, %v287, %v288
        %v299 = vsel %vm293, %v286, %v287
        %v300 = vsel %vm293, %v285, %v286
        %v301 = vsel %vm293, %v292, %v285
        %v302 = vsel %vm277, 1, 0
        %v303 = vsel %vm278, 1, 0
        %v304 = vsel %vm279, 1, 0
        %v305 = vsel %vm280, 1, 0
        %v306 = vsel %vm281, 1, 0
        %v307 = vsel %vm282, 1, 0
        %v308 = vsel %vm283, 1, 0
        %v309 = vsel %vm284, 1, 0
        %vm310 = vcmp.eq.s32.totalorder %v302, 1
        %vm311 = vcmp.eq.s32.totalorder %v303, 1
        %vm312 = vcmp.eq.s32.totalorder %v304, 1
        %vm313 = vcmp.eq.s32.totalorder %v305, 1
        %vm314 = vcmp.eq.s32.totalorder %v306, 1
        %vm315 = vcmp.eq.s32.totalorder %v307, 1
        %vm316 = vcmp.eq.s32.totalorder %v308, 1
        %vm317 = vcmp.eq.s32.totalorder %v309, 1
        %v318 = vsel %vm310, %v300, 0.0
        %v319 = vsel %vm311, %v299, 0.0
        %v320 = vsel %vm312, %v298, 0.0
        %v321 = vsel %vm313, %v297, 0.0
        %v322 = vsel %vm314, %v296, 0.0
        %v323 = vsel %vm315, %v295, 0.0
        %v324 = vsel %vm316, %v294, 0.0
        %v325 = vsel %vm317, %v301, 0.0
        %334 = vrot.lane.b32.xlu0 %v202, 4
        %v335 = vpop.permute.xlu0 %334
        %336 = vrot.lane.b32.xlu0 %v203, 4
        %v337 = vpop.permute.xlu0 %336
        %338 = vrot.lane.b32.xlu0 %v204, 4
        %v339 = vpop.permute.xlu0 %338
        %340 = vrot.lane.b32.xlu0 %v205, 4
        %v341 = vpop.permute.xlu0 %340
        %342 = vrot.lane.b32.xlu0 %v206, 4
        %v343 = vpop.permute.xlu0 %342
        %344 = vrot.lane.b32.xlu0 %v207, 4
        %v345 = vpop.permute.xlu0 %344
        %346 = vrot.lane.b32.xlu0 %v208, 4
        %v347 = vpop.permute.xlu0 %346
        %348 = vrot.lane.b32.xlu0 %v209, 4
        %v349 = vpop.permute.xlu0 %348
        %366 = vrot.lane.b32.xlu0 %v318, 8
        %v367 = vpop.permute.xlu0 %366
        %368 = vrot.lane.b32.xlu0 %v319, 8
        %v369 = vpop.permute.xlu0 %368
        %370 = vrot.lane.b32.xlu0 %v320, 8
        %v371 = vpop.permute.xlu0 %370
        %372 = vrot.lane.b32.xlu0 %v321, 8
        %v373 = vpop.permute.xlu0 %372
        %374 = vrot.lane.b32.xlu0 %v322, 8
        %v375 = vpop.permute.xlu0 %374
        %376 = vrot.lane.b32.xlu0 %v323, 8
        %v377 = vpop.permute.xlu0 %376
        %378 = vrot.lane.b32.xlu0 %v324, 8
        %v379 = vpop.permute.xlu0 %378
        %380 = vrot.lane.b32.xlu0 %v325, 8
        %v381 = vpop.permute.xlu0 %380
        %vm390 = vcmask 31744
        %v391 = vsel %vm390, %v269, %v335
        %v392 = vsel %vm390, %v270, %v337
        %v393 = vsel %vm390, %v271, %v339
        %v394 = vsel %vm390, %v272, %v341
        %v395 = vsel %vm390, %v273, %v343
        %v396 = vsel %vm390, %v274, %v345
        %v397 = vsel %vm390, %v275, %v347
        %v398 = vsel %vm390, %v276, %v349
        %vm399 = vcmask 64512
        %v400 = vsel %vm399, %v391, %v367
        %v401 = vsel %vm399, %v392, %v369
        %v402 = vsel %vm399, %v393, %v371
        %v403 = vsel %vm399, %v394, %v373
        %v404 = vsel %vm399, %v395, %v375
        %v405 = vsel %vm399, %v396, %v377
        %v406 = vsel %vm399, %v397, %v379
        %v407 = vsel %vm399, %v398, %v381
        %v408 = vld [vmem:[#allocation3] sm:$0xff]
        %v409 = vld [vmem:[#allocation3 + $0x8] sm:$0xf]
        %v410 = vld [vmem:[#allocation3 + $0x10] sm:$0x1]
        %v411 = vlaneseq
        %v412 = vshrl.u32 %v411, 7
        %v413 = vsub.s32 0, %v412
        %v414 = vrot.slane %v410, %v413
        %vm415 = vcmask 97280
        %v417 = vsel %vm415, %v400, 0
        %v420 = vsel %vm415, %v401, 0
        %v423 = vsel %vm415, %v402, 0
        %v426 = vsel %vm415, %v403, 0
        %v429 = vsel %vm415, %v404, 0
        %v432 = vsel %vm415, %v405, 0
        %v435 = vsel %vm415, %v406, 0
        %v438 = vsel %vm415, %v407, 0
        %vm440 = vcmask 1043456
        %v442 = vsel %vm440, %v409, 0
        %444 = vmatprep.subr.mxu0 0.0
        %445 = vmatpush1.msra.mxu0 0.0
        %446 = vmatprep.subr.mxu0 0.0
        %447 = vmatpush1.msra.mxu0 0.0
        %448 = vmatprep.subr.mxu0 0.0
        %449 = vmatpush1.msra.mxu0 0.0
        %450 = vmatprep.subr.mxu0 0.0
        %451 = vmatpush1.msra.mxu0 0.0
        %452 = vmatprep.subr.mxu0 0.0
        %453 = vmatpush1.msra.mxu0 0.0
        %454 = vmatprep.subr.mxu0 0.0
        %455 = vmatpush1.msra.mxu0 0.0
        %456 = vmatprep.subr.mxu0 0.0
        %457 = vmatpush1.msra.mxu0 0.0
        %458 = vmatprep.subr.mxu0 0.0
        %459 = vmatpush1.msra.mxu0 0.0
        %460 = vmatprep.subr.mxu0 0.0
        %461 = vmatpush1.msra.mxu0 0.0
        %462 = vmatprep.subr.mxu0 0.0
        %463 = vmatpush1.msra.mxu0 0.0
        %464 = vmatprep.subr.mxu0 0.0
        %465 = vmatpush1.msra.mxu0 0.0
        %466 = vmatprep.subr.mxu0 0.0
        %467 = vmatpush1.msra.mxu0 0.0
        %468 = vmatprep.subr.mxu0 0.0
        %469 = vmatpush1.msra.mxu0 0.0
        %470 = vmatprep.subr.mxu0 0.0
        %471 = vmatpush1.msra.mxu0 0.0
        %472 = vmatprep.subr.mxu0 0.0
        %473 = vmatpush1.msra.mxu0 %v442
        %474 = vmatprep.subr.mxu0 0.0
        %475 = vmatpush1.msra.mxu0 %v408
        %476 = vmatprep.subr.mxu0 0.0
        %477 = vmatpush2.msra.mxu0 0.0
        %478 = vmatprep.subr.mxu0 0.0
        %479 = vmatpush2.msra.mxu0 0.0
        %480 = vmatprep.subr.mxu0 0.0
        %481 = vmatpush2.msra.mxu0 0.0
        %482 = vmatprep.subr.mxu0 0.0
        %483 = vmatpush2.msra.mxu0 0.0
        %484 = vmatprep.subr.mxu0 0.0
        %485 = vmatpush2.msra.mxu0 0.0
        %486 = vmatprep.subr.mxu0 0.0
        %487 = vmatpush2.msra.mxu0 0.0
        %488 = vmatprep.subr.mxu0 0.0
        %489 = vmatpush2.msra.mxu0 0.0
        %490 = vmatprep.subr.mxu0 0.0
        %491 = vmatpush2.msra.mxu0 0.0
        %492 = vmatprep.subr.mxu0 0.0
        %493 = vmatpush2.msra.mxu0 0.0
        %494 = vmatprep.subr.mxu0 0.0
        %495 = vmatpush2.msra.mxu0 0.0
        %496 = vmatprep.subr.mxu0 0.0
        %497 = vmatpush2.msra.mxu0 0.0
        %498 = vmatprep.subr.mxu0 0.0
        %499 = vmatpush2.msra.mxu0 0.0
        %500 = vmatprep.subr.mxu0 0.0
        %501 = vmatpush2.msra.mxu0 0.0
        %502 = vmatprep.subr.mxu0 0.0
        %503 = vmatpush2.msra.mxu0 0.0
        %504 = vmatprep.subr.mxu0 0.0
        %505 = vmatpush2.msra.mxu0 0.0
        %506 = vmatprep.subr.mxu0 0.0
        %507 = vmatpush2.msra.mxu0 0.0
        %508 = vmatprep.mubr.f32.mxu0 0.0
        %509 = vmatmul.mubr.f32.gmra.mxu0 %v417
        %v510 = vpop.f32.mrf.mxu0
        %v511 = vadd.f32 %v414, %v510
        %v512 = vpop.f32.mrf.mxu0
        %513 = vmatprep.mubr.f32.mxu0 0.0
        %514 = vmatmul.mubr.f32.gmra.mxu0 %v420
        %v515 = vpop.f32.mrf.mxu0
        %v516 = vadd.f32 %v414, %v515
        %v517 = vpop.f32.mrf.mxu0
        %518 = vmatprep.mubr.f32.mxu0 0.0
        %519 = vmatmul.mubr.f32.gmra.mxu0 %v423
        %v520 = vpop.f32.mrf.mxu0
        %v521 = vadd.f32 %v414, %v520
        %v522 = vpop.f32.mrf.mxu0
        %523 = vmatprep.mubr.f32.mxu0 0.0
        %524 = vmatmul.mubr.f32.gmra.mxu0 %v426
        %v525 = vpop.f32.mrf.mxu0
        %v526 = vadd.f32 %v414, %v525
        %v527 = vpop.f32.mrf.mxu0
        %528 = vmatprep.mubr.f32.mxu0 0.0
        %529 = vmatmul.mubr.f32.gmra.mxu0 %v429
        %v530 = vpop.f32.mrf.mxu0
        %v531 = vadd.f32 %v414, %v530
        %v532 = vpop.f32.mrf.mxu0
        %533 = vmatprep.mubr.f32.mxu0 0.0
        %534 = vmatmul.mubr.f32.gmra.mxu0 %v432
        %v535 = vpop.f32.mrf.mxu0
        %v536 = vadd.f32 %v414, %v535
        %v537 = vpop.f32.mrf.mxu0
        %538 = vmatprep.mubr.f32.mxu0 0.0
        %539 = vmatmul.mubr.f32.gmra.mxu0 %v435
        %v540 = vpop.f32.mrf.mxu0
        %v541 = vadd.f32 %v414, %v540
        %v542 = vpop.f32.mrf.mxu0
        %543 = vmatprep.mubr.f32.mxu0 0.0
        %544 = vmatmul.mubr.f32.gmra.mxu0 %v438
        %v545 = vpop.f32.mrf.mxu0
        %v546 = vadd.f32 %v414, %v545
        %v547 = vpop.f32.mrf.mxu0
        %548 = vdwg.mxu0
        %v549 = vmax.f32 %v511, 0.0
        %v550 = vmax.f32 %v516, 0.0
        %v551 = vmax.f32 %v521, 0.0
        %v552 = vmax.f32 %v526, 0.0
        %v553 = vmax.f32 %v531, 0.0
        %v554 = vmax.f32 %v536, 0.0
        %v555 = vmax.f32 %v541, 0.0
        %v556 = vmax.f32 %v546, 0.0
        %v557 = vrot.slane %v549, 1
        %v558 = vrot.slane %v550, 1
        %v559 = vrot.slane %v551, 1
        %v560 = vrot.slane %v552, 1
        %v561 = vrot.slane %v553, 1
        %v562 = vrot.slane %v554, 1
        %v563 = vrot.slane %v555, 1
        %v564 = vrot.slane %v556, 1
        %v565 = vsel %vm293, %v563, %v564
        %v566 = vsel %vm293, %v562, %v563
        %v567 = vsel %vm293, %v561, %v562
        %v568 = vsel %vm293, %v560, %v561
        %v569 = vsel %vm293, %v559, %v560
        %v570 = vsel %vm293, %v558, %v559
        %v571 = vsel %vm293, %v557, %v558
        %v572 = vsel %vm293, %v564, %v557
        %v573 = vmax.f32 %v549, %v571
        %v574 = vmax.f32 %v550, %v570
        %v575 = vmax.f32 %v551, %v569
        %v576 = vmax.f32 %v552, %v568
        %v577 = vmax.f32 %v553, %v567
        %v578 = vmax.f32 %v554, %v566
        %v579 = vmax.f32 %v555, %v565
        %v580 = vmax.f32 %v556, %v572
        %581 = vst.msk [vmem:[#allocation2] sm:$0xff] %vm399, %v573
        %582 = vst.msk [vmem:[#allocation2 + $0x8] sm:$0xff] %vm399, %v574
        %583 = vst.msk [vmem:[#allocation2 + $0x10] sm:$0xff] %vm399, %v575
        %584 = vst.msk [vmem:[#allocation2 + $0x18] sm:$0xff] %vm399, %v576
        %585 = vst.msk [vmem:[#allocation2 + $0x20] sm:$0xff] %vm399, %v577
        %586 = vst.msk [vmem:[#allocation2 + $0x28] sm:$0xff] %vm399, %v578
        %587 = vst.msk [vmem:[#allocation2 + $0x30] sm:$0xff] %vm399, %v579
        %588 = vst.msk [vmem:[#allocation2 + $0x38] sm:$0xff] %vm399, %v580
        %v589 = vld [vmem:[#allocation2] ss:$2 sm:$0xff]
        %s590 = scalar_lea.vmem [#allocation2], 16
        %v591 = vld [vmem:[%s590] ss:$2 sm:$0xff]
        %s592 = scalar_lea.vmem [#allocation2], 32
        %v593 = vld [vmem:[%s592] ss:$2 sm:$0xff]
        %s594 = scalar_lea.vmem [#allocation2], 48
        %v595 = vld [vmem:[%s594] ss:$2 sm:$0xff]
        %v596 = vand.u32 %v212, 31
        %v597 = vand.u32 %v213, 31
        %v598 = vand.u32 %v214, 31
        %v599 = vand.u32 %v215, 31
        %vm600 = vcmp.ne.s32.totalorder %v596, 0
        %vm601 = vcmp.ne.s32.totalorder %v597, 0
        %vm602 = vcmp.ne.s32.totalorder %v598, 0
        %vm603 = vcmp.ne.s32.totalorder %v599, 0
        %v604 = vrot.slane %v589, 7
        %v605 = vrot.slane %v591, 7
        %v606 = vrot.slane %v593, 7
        %v607 = vrot.slane %v595, 7
        %v608 = vsel %vm244, %v606, %v607
        %v609 = vsel %vm244, %v605, %v606
        %v610 = vsel %vm244, %v604, %v605
        %v611 = vsel %vm244, %v607, %v604
        %v612 = vsel %vm600, 1, 0
        %v613 = vsel %vm601, 1, 0
        %v614 = vsel %vm602, 1, 0
        %v615 = vsel %vm603, 1, 0
        %vm616 = vcmp.eq.s32.totalorder %v612, 1
        %vm617 = vcmp.eq.s32.totalorder %v613, 1
        %vm618 = vcmp.eq.s32.totalorder %v614, 1
        %vm619 = vcmp.eq.s32.totalorder %v615, 1
        %v620 = vsel %vm616, %v611, 0.0
        %v621 = vsel %vm617, %v610, 0.0
        %v622 = vsel %vm618, %v609, 0.0
        %v623 = vsel %vm619, %v608, 0.0
        %vm624 = vcmp.ne.s32.totalorder %v596, 31
        %vm625 = vcmp.ne.s32.totalorder %v597, 31
        %vm626 = vcmp.ne.s32.totalorder %v598, 31
        %vm627 = vcmp.ne.s32.totalorder %v599, 31
        %v628 = vrot.slane %v589, 1
        %v629 = vrot.slane %v591, 1
        %v630 = vrot.slane %v593, 1
        %v631 = vrot.slane %v595, 1
        %v632 = vsel %vm293, %v630, %v631
        %v633 = vsel %vm293, %v629, %v630
        %v634 = vsel %vm293, %v628, %v629
        %v635 = vsel %vm293, %v631, %v628
        %v636 = vsel %vm624, 1, 0
        %v637 = vsel %vm625, 1, 0
        %v638 = vsel %vm626, 1, 0
        %v639 = vsel %vm627, 1, 0
        %vm640 = vcmp.eq.s32.totalorder %v636, 1
        %vm641 = vcmp.eq.s32.totalorder %v637, 1
        %vm642 = vcmp.eq.s32.totalorder %v638, 1
        %vm643 = vcmp.eq.s32.totalorder %v639, 1
        %v644 = vsel %vm640, %v634, 0.0
        %v645 = vsel %vm641, %v633, 0.0
        %v646 = vsel %vm642, %v632, 0.0
        %v647 = vsel %vm643, %v635, 0.0
        %652 = vrot.lane.b32.xlu0 %v589, 8
        %v653 = vpop.permute.xlu0 %652
        %654 = vrot.lane.b32.xlu0 %v591, 8
        %v655 = vpop.permute.xlu0 %654
        %656 = vrot.lane.b32.xlu0 %v593, 8
        %v657 = vpop.permute.xlu0 %656
        %658 = vrot.lane.b32.xlu0 %v595, 8
        %v659 = vpop.permute.xlu0 %658
        %668 = vrot.lane.b32.xlu0 %v644, 16
        %v669 = vpop.permute.xlu0 %668
        %670 = vrot.lane.b32.xlu0 %v645, 16
        %v671 = vpop.permute.xlu0 %670
        %672 = vrot.lane.b32.xlu0 %v646, 16
        %v673 = vpop.permute.xlu0 %672
        %674 = vrot.lane.b32.xlu0 %v647, 16
        %v675 = vpop.permute.xlu0 %674
        %v680 = vsel %vm399, %v620, %v653
        %v681 = vsel %vm399, %v621, %v655
        %v682 = vsel %vm399, %v622, %v657
        %v683 = vsel %vm399, %v623, %v659
        %vm684 = vcmask 130048
        %v685 = vsel %vm684, %v680, %v669
        %v686 = vsel %vm684, %v681, %v671
        %v687 = vsel %vm684, %v682, %v673
        %v688 = vsel %vm684, %v683, %v675
        %v689 = vld [vmem:[#allocation3 + $0x18] sm:$0xff]
        %v690 = vld [vmem:[#allocation3 + $0x20] sm:$0xff]
        %v691 = vld [vmem:[#allocation3 + $0x28] sm:$0xff]
        %v692 = vld [vmem:[#allocation3 + $0x30] sm:$0x1]
        %v693 = vlaneseq
        %v694 = vshrl.u32 %v693, 7
        %v695 = vsub.s32 0, %v694
        %v696 = vrot.slane %v692, %v695
        %vm697 = vcmask 195584
        %v699 = vsel %vm697, %v685, 0
        %v702 = vsel %vm697, %v686, 0
        %v705 = vsel %vm697, %v687, 0
        %v708 = vsel %vm697, %v688, 0
        %710 = vmatprep.subr.mxu0 0.0
        %711 = vmatpush1.msra.mxu0 0.0
        %712 = vmatprep.subr.mxu0 0.0
        %713 = vmatpush1.msra.mxu0 0.0
        %714 = vmatprep.subr.mxu0 0.0
        %715 = vmatpush1.msra.mxu0 0.0
        %716 = vmatprep.subr.mxu0 0.0
        %717 = vmatpush1.msra.mxu0 0.0
        %718 = vmatprep.subr.mxu0 0.0
        %719 = vmatpush1.msra.mxu0 0.0
        %720 = vmatprep.subr.mxu0 0.0
        %721 = vmatpush1.msra.mxu0 0.0
        %722 = vmatprep.subr.mxu0 0.0
        %723 = vmatpush1.msra.mxu0 0.0
        %724 = vmatprep.subr.mxu0 0.0
        %725 = vmatpush1.msra.mxu0 0.0
        %726 = vmatprep.subr.mxu0 0.0
        %727 = vmatpush1.msra.mxu0 0.0
        %728 = vmatprep.subr.mxu0 0.0
        %729 = vmatpush1.msra.mxu0 0.0
        %730 = vmatprep.subr.mxu0 0.0
        %731 = vmatpush1.msra.mxu0 0.0
        %732 = vmatprep.subr.mxu0 0.0
        %733 = vmatpush1.msra.mxu0 0.0
        %734 = vmatprep.subr.mxu0 0.0
        %735 = vmatpush1.msra.mxu0 0.0
        %736 = vmatprep.subr.mxu0 0.0
        %737 = vmatpush1.msra.mxu0 %v691
        %738 = vmatprep.subr.mxu0 0.0
        %739 = vmatpush1.msra.mxu0 %v690
        %740 = vmatprep.subr.mxu0 0.0
        %741 = vmatpush1.msra.mxu0 %v689
        %742 = vmatprep.subr.mxu0 0.0
        %743 = vmatpush2.msra.mxu0 0.0
        %744 = vmatprep.subr.mxu0 0.0
        %745 = vmatpush2.msra.mxu0 0.0
        %746 = vmatprep.subr.mxu0 0.0
        %747 = vmatpush2.msra.mxu0 0.0
        %748 = vmatprep.subr.mxu0 0.0
        %749 = vmatpush2.msra.mxu0 0.0
        %750 = vmatprep.subr.mxu0 0.0
        %751 = vmatpush2.msra.mxu0 0.0
        %752 = vmatprep.subr.mxu0 0.0
        %753 = vmatpush2.msra.mxu0 0.0
        %754 = vmatprep.subr.mxu0 0.0
        %755 = vmatpush2.msra.mxu0 0.0
        %756 = vmatprep.subr.mxu0 0.0
        %757 = vmatpush2.msra.mxu0 0.0
        %758 = vmatprep.subr.mxu0 0.0
        %759 = vmatpush2.msra.mxu0 0.0
        %760 = vmatprep.subr.mxu0 0.0
        %761 = vmatpush2.msra.mxu0 0.0
        %762 = vmatprep.subr.mxu0 0.0
        %763 = vmatpush2.msra.mxu0 0.0
        %764 = vmatprep.subr.mxu0 0.0
        %765 = vmatpush2.msra.mxu0 0.0
        %766 = vmatprep.subr.mxu0 0.0
        %767 = vmatpush2.msra.mxu0 0.0
        %768 = vmatprep.subr.mxu0 0.0
        %769 = vmatpush2.msra.mxu0 0.0
        %770 = vmatprep.subr.mxu0 0.0
        %771 = vmatpush2.msra.mxu0 0.0
        %772 = vmatprep.subr.mxu0 0.0
        %773 = vmatpush2.msra.mxu0 0.0
        %774 = vmatprep.mubr.f32.mxu0 0.0
        %775 = vmatmul.mubr.f32.gmra.mxu0 %v699
        %v776 = vpop.f32.mrf.mxu0
        %v777 = vadd.f32 %v696, %v776
        %v778 = vpop.f32.mrf.mxu0
        %779 = vmatprep.mubr.f32.mxu0 0.0
        %780 = vmatmul.mubr.f32.gmra.mxu0 %v702
        %v781 = vpop.f32.mrf.mxu0
        %v782 = vadd.f32 %v696, %v781
        %v783 = vpop.f32.mrf.mxu0
        %784 = vmatprep.mubr.f32.mxu0 0.0
        %785 = vmatmul.mubr.f32.gmra.mxu0 %v705
        %v786 = vpop.f32.mrf.mxu0
        %v787 = vadd.f32 %v696, %v786
        %v788 = vpop.f32.mrf.mxu0
        %789 = vmatprep.mubr.f32.mxu0 0.0
        %790 = vmatmul.mubr.f32.gmra.mxu0 %v708
        %v791 = vpop.f32.mrf.mxu0
        %v792 = vadd.f32 %v696, %v791
        %v793 = vpop.f32.mrf.mxu0
        %794 = vdwg.mxu0
        %v795 = vmax.f32 %v777, 0.0
        %v796 = vmax.f32 %v782, 0.0
        %v797 = vmax.f32 %v787, 0.0
        %v798 = vmax.f32 %v792, 0.0
        %v799 = vrot.slane %v795, 1
        %v800 = vrot.slane %v796, 1
        %v801 = vrot.slane %v797, 1
        %v802 = vrot.slane %v798, 1
        %v803 = vsel %vm293, %v801, %v802
        %v804 = vsel %vm293, %v800, %v801
        %v805 = vsel %vm293, %v799, %v800
        %v806 = vsel %vm293, %v802, %v799
        %v807 = vmax.f32 %v795, %v805
        %v808 = vmax.f32 %v796, %v804
        %v809 = vmax.f32 %v797, %v803
        %v810 = vmax.f32 %v798, %v806
        %811 = vst.msk [vmem:[#allocation2] sm:$0xff] %vm684, %v807
        %812 = vst.msk [vmem:[#allocation2 + $0x8] sm:$0xff] %vm684, %v808
        %813 = vst.msk [vmem:[#allocation2 + $0x10] sm:$0xff] %vm684, %v809
        %814 = vst.msk [vmem:[#allocation2 + $0x18] sm:$0xff] %vm684, %v810
        %v815 = vld [vmem:[#allocation2] ss:$2 sm:$0xff]
        %v816 = vld [vmem:[%s590] ss:$2 sm:$0xff]
        %v817 = vand.u32 %v212, 15
        %v818 = vand.u32 %v213, 15
        %vm819 = vcmp.ne.s32.totalorder %v817, 0
        %vm820 = vcmp.ne.s32.totalorder %v818, 0
        %v821 = vrot.slane %v815, 7
        %v822 = vrot.slane %v816, 7
        %v823 = vsel %vm244, %v821, %v822
        %v824 = vsel %vm244, %v822, %v821
        %v825 = vsel %vm819, 1, 0
        %v826 = vsel %vm820, 1, 0
        %vm827 = vcmp.eq.s32.totalorder %v825, 1
        %vm828 = vcmp.eq.s32.totalorder %v826, 1
        %v829 = vsel %vm827, %v824, 0.0
        %v830 = vsel %vm828, %v823, 0.0
        %vm831 = vcmp.ne.s32.totalorder %v817, 15
        %vm832 = vcmp.ne.s32.totalorder %v818, 15
        %v833 = vrot.slane %v815, 1
        %v834 = vrot.slane %v816, 1
        %v835 = vsel %vm293, %v833, %v834
        %v836 = vsel %vm293, %v834, %v833
        %v837 = vsel %vm831, 1, 0
        %v838 = vsel %vm832, 1, 0
        %vm839 = vcmp.eq.s32.totalorder %v837, 1
        %vm840 = vcmp.eq.s32.totalorder %v838, 1
        %v841 = vsel %vm839, %v835, 0.0
        %v842 = vsel %vm840, %v836, 0.0
        %845 = vrot.lane.b32.xlu0 %v815, 16
        %v846 = vpop.permute.xlu0 %845
        %847 = vrot.lane.b32.xlu0 %v816, 16
        %v848 = vpop.permute.xlu0 %847
        %853 = vrot.lane.b32.xlu0 %v841, 32
        %v854 = vpop.permute.xlu0 %853
        %855 = vrot.lane.b32.xlu0 %v842, 32
        %v856 = vpop.permute.xlu0 %855
        %v859 = vsel %vm684, %v829, %v846
        %v860 = vsel %vm684, %v830, %v848
        %vm861 = vcmask 261120
        %v862 = vsel %vm861, %v859, %v854
        %v863 = vsel %vm861, %v860, %v856
        %v864 = vld [vmem:[#allocation3 + $0x38] sm:$0xff]
        %v865 = vld [vmem:[#allocation3 + $0x40] sm:$0xff]
        %v866 = vld [vmem:[#allocation3 + $0x48] sm:$0xff]
        %v867 = vld [vmem:[#allocation3 + $0x50] sm:$0xff]
        %v868 = vld [vmem:[#allocation3 + $0x58] sm:$0xff]
        %v869 = vld [vmem:[#allocation3 + $0x60] sm:$0xff]
        %v870 = vld [vmem:[#allocation3 + $0x68] sm:$0x1]
        %v871 = vlaneseq
        %v872 = vshrl.u32 %v871, 7
        %v873 = vsub.s32 0, %v872
        %v874 = vrot.slane %v870, %v873
        %vm875 = vcmask 392192
        %v877 = vsel %vm875, %v862, 0
        %v880 = vsel %vm875, %v863, 0
        %882 = vmatprep.subr.mxu0 0.0
        %883 = vmatpush1.msra.mxu0 0.0
        %884 = vmatprep.subr.mxu0 0.0
        %885 = vmatpush1.msra.mxu0 0.0
        %886 = vmatprep.subr.mxu0 0.0
        %887 = vmatpush1.msra.mxu0 0.0
        %888 = vmatprep.subr.mxu0 0.0
        %889 = vmatpush1.msra.mxu0 0.0
        %890 = vmatprep.subr.mxu0 0.0
        %891 = vmatpush1.msra.mxu0 0.0
        %892 = vmatprep.subr.mxu0 0.0
        %893 = vmatpush1.msra.mxu0 0.0
        %894 = vmatprep.subr.mxu0 0.0
        %895 = vmatpush1.msra.mxu0 0.0
        %896 = vmatprep.subr.mxu0 0.0
        %897 = vmatpush1.msra.mxu0 0.0
        %898 = vmatprep.subr.mxu0 0.0
        %899 = vmatpush1.msra.mxu0 0.0
        %900 = vmatprep.subr.mxu0 0.0
        %901 = vmatpush1.msra.mxu0 0.0
        %902 = vmatprep.subr.mxu0 0.0
        %903 = vmatpush1.msra.mxu0 %v869
        %904 = vmatprep.subr.mxu0 0.0
        %905 = vmatpush1.msra.mxu0 %v868
        %906 = vmatprep.subr.mxu0 0.0
        %907 = vmatpush1.msra.mxu0 %v867
        %908 = vmatprep.subr.mxu0 0.0
        %909 = vmatpush1.msra.mxu0 %v866
        %910 = vmatprep.subr.mxu0 0.0
        %911 = vmatpush1.msra.mxu0 %v865
        %912 = vmatprep.subr.mxu0 0.0
        %913 = vmatpush1.msra.mxu0 %v864
        %914 = vmatprep.subr.mxu0 0.0
        %915 = vmatpush2.msra.mxu0 0.0
        %916 = vmatprep.subr.mxu0 0.0
        %917 = vmatpush2.msra.mxu0 0.0
        %918 = vmatprep.subr.mxu0 0.0
        %919 = vmatpush2.msra.mxu0 0.0
        %920 = vmatprep.subr.mxu0 0.0
        %921 = vmatpush2.msra.mxu0 0.0
        %922 = vmatprep.subr.mxu0 0.0
        %923 = vmatpush2.msra.mxu0 0.0
        %924 = vmatprep.subr.mxu0 0.0
        %925 = vmatpush2.msra.mxu0 0.0
        %926 = vmatprep.subr.mxu0 0.0
        %927 = vmatpush2.msra.mxu0 0.0
        %928 = vmatprep.subr.mxu0 0.0
        %929 = vmatpush2.msra.mxu0 0.0
        %930 = vmatprep.subr.mxu0 0.0
        %931 = vmatpush2.msra.mxu0 0.0
        %932 = vmatprep.subr.mxu0 0.0
        %933 = vmatpush2.msra.mxu0 0.0
        %934 = vmatprep.subr.mxu0 0.0
        %935 = vmatpush2.msra.mxu0 0.0
        %936 = vmatprep.subr.mxu0 0.0
        %937 = vmatpush2.msra.mxu0 0.0
        %938 = vmatprep.subr.mxu0 0.0
        %939 = vmatpush2.msra.mxu0 0.0
        %940 = vmatprep.subr.mxu0 0.0
        %941 = vmatpush2.msra.mxu0 0.0
        %942 = vmatprep.subr.mxu0 0.0
        %943 = vmatpush2.msra.mxu0 0.0
        %944 = vmatprep.subr.mxu0 0.0
        %945 = vmatpush2.msra.mxu0 0.0
        %946 = vmatprep.mubr.f32.mxu0 0.0
        %947 = vmatmul.mubr.f32.gmra.mxu0 %v877
        %v948 = vpop.f32.mrf.mxu0
        %v949 = vadd.f32 %v874, %v948
        %v950 = vpop.f32.mrf.mxu0
        %951 = vmatprep.mubr.f32.mxu0 0.0
        %952 = vmatmul.mubr.f32.gmra.mxu0 %v880
        %v953 = vpop.f32.mrf.mxu0
        %v954 = vadd.f32 %v874, %v953
        %v955 = vpop.f32.mrf.mxu0
        %956 = vdwg.mxu0
        %v957 = vmax.f32 %v949, 0.0
        %v958 = vmax.f32 %v954, 0.0
        %v959 = vrot.slane %v957, 1
        %v960 = vrot.slane %v958, 1
        %v961 = vsel %vm293, %v959, %v960
        %v962 = vsel %vm293, %v960, %v959
        %v963 = vmax.f32 %v957, %v961
        %v964 = vmax.f32 %v958, %v962
        %965 = vst.msk [vmem:[#allocation2] sm:$0xff] %vm861, %v963
        %966 = vst.msk [vmem:[#allocation2 + $0x8] sm:$0xff] %vm861, %v964
        %v967 = vld [vmem:[#allocation2] ss:$2 sm:$0xff]
        %v968 = vand.u32 %v212, 7
        %vm969 = vcmp.ne.s32.totalorder %v968, 0
        %v970 = vrot.slane %v967, 7
        %v971 = vsel %vm969, 1, 0
        %vm972 = vcmp.eq.s32.totalorder %v971, 1
        %v973 = vsel %vm972, %v970, 0.0
        %vm974 = vcmp.ne.s32.totalorder %v968, 7
        %v975 = vrot.slane %v967, 1
        %v976 = vsel %vm974, 1, 0
        %vm977 = vcmp.eq.s32.totalorder %v976, 1
        %v978 = vsel %vm977, %v975, 0.0
        %980 = vrot.lane.b32.xlu0 %v967, 32
        %v981 = vpop.permute.xlu0 %980
        %984 = vrot.lane.b32.xlu0 %v978, 64
        %v985 = vpop.permute.xlu0 %984
        %v987 = vsel %vm861, %v973, %v981
        %vm988 = vcmask 523264
        %v989 = vsel %vm988, %v987, %v985
        %v990 = vld [vmem:[#allocation3 + $0x70] sm:$0xff]
        %v991 = vld [vmem:[#allocation3 + $0x78] sm:$0xff]
        %v992 = vld [vmem:[#allocation3 + $0x80] sm:$0xff]
        %v993 = vld [vmem:[#allocation3 + $0x88] sm:$0xff]
        %v994 = vld [vmem:[#allocation3 + $0x90] sm:$0xff]
        %v995 = vld [vmem:[#allocation3 + $0x98] sm:$0xff]
        %v996 = vld [vmem:[#allocation3 + $0xa0] sm:$0xff]
        %v997 = vld [vmem:[#allocation3 + $0xa8] sm:$0xff]
        %v998 = vld [vmem:[#allocation3 + $0xb0] sm:$0xff]
        %v999 = vld [vmem:[#allocation3 + $0xb8] sm:$0xff]
        %v1000 = vld [vmem:[#allocation3 + $0xc0] sm:$0xff]
        %v1001 = vld [vmem:[#allocation3 + $0xc8] sm:$0xff]
        %v1002 = vld [vmem:[#allocation3 + $0xd0] sm:$0x1]
        %v1003 = vlaneseq
        %v1004 = vshrl.u32 %v1003, 7
        %v1005 = vsub.s32 0, %v1004
        %v1006 = vrot.slane %v1002, %v1005
        %vm1007 = vcmask 785408
        %v1009 = vsel %vm1007, %v989, 0
        %1011 = vmatprep.subr.mxu0 0.0
        %1012 = vmatpush1.msra.mxu0 0.0
        %1013 = vmatprep.subr.mxu0 0.0
        %1014 = vmatpush1.msra.mxu0 0.0
        %1015 = vmatprep.subr.mxu0 0.0
        %1016 = vmatpush1.msra.mxu0 0.0
        %1017 = vmatprep.subr.mxu0 0.0
        %1018 = vmatpush1.msra.mxu0 0.0
        %1019 = vmatprep.subr.mxu0 0.0
        %1020 = vmatpush1.msra.mxu0 %v1001
        %1021 = vmatprep.subr.mxu0 0.0
        %1022 = vmatpush1.msra.mxu0 %v1000
        %1023 = vmatprep.subr.mxu0 0.0
        %1024 = vmatpush1.msra.mxu0 %v999
        %1025 = vmatprep.subr.mxu0 0.0
        %1026 = vmatpush1.msra.mxu0 %v998
        %1027 = vmatprep.subr.mxu0 0.0
        %1028 = vmatpush1.msra.mxu0 %v997
        %1029 = vmatprep.subr.mxu0 0.0
        %1030 = vmatpush1.msra.mxu0 %v996
        %1031 = vmatprep.subr.mxu0 0.0
        %1032 = vmatpush1.msra.mxu0 %v995
        %1033 = vmatprep.subr.mxu0 0.0
        %1034 = vmatpush1.msra.mxu0 %v994
        %1035 = vmatprep.subr.mxu0 0.0
        %1036 = vmatpush1.msra.mxu0 %v993
        %1037 = vmatprep.subr.mxu0 0.0
        %1038 = vmatpush1.msra.mxu0 %v992
        %1039 = vmatprep.subr.mxu0 0.0
        %1040 = vmatpush1.msra.mxu0 %v991
        %1041 = vmatprep.subr.mxu0 0.0
        %1042 = vmatpush1.msra.mxu0 %v990
        %1043 = vmatprep.subr.mxu0 0.0
        %1044 = vmatpush2.msra.mxu0 0.0
        %1045 = vmatprep.subr.mxu0 0.0
        %1046 = vmatpush2.msra.mxu0 0.0
        %1047 = vmatprep.subr.mxu0 0.0
        %1048 = vmatpush2.msra.mxu0 0.0
        %1049 = vmatprep.subr.mxu0 0.0
        %1050 = vmatpush2.msra.mxu0 0.0
        %1051 = vmatprep.subr.mxu0 0.0
        %1052 = vmatpush2.msra.mxu0 0.0
        %1053 = vmatprep.subr.mxu0 0.0
        %1054 = vmatpush2.msra.mxu0 0.0
        %1055 = vmatprep.subr.mxu0 0.0
        %1056 = vmatpush2.msra.mxu0 0.0
        %1057 = vmatprep.subr.mxu0 0.0
        %1058 = vmatpush2.msra.mxu0 0.0
        %1059 = vmatprep.subr.mxu0 0.0
        %1060 = vmatpush2.msra.mxu0 0.0
        %1061 = vmatprep.subr.mxu0 0.0
        %1062 = vmatpush2.msra.mxu0 0.0
        %1063 = vmatprep.subr.mxu0 0.0
        %1064 = vmatpush2.msra.mxu0 0.0
        %1065 = vmatprep.subr.mxu0 0.0
        %1066 = vmatpush2.msra.mxu0 0.0
        %1067 = vmatprep.subr.mxu0 0.0
        %1068 = vmatpush2.msra.mxu0 0.0
        %1069 = vmatprep.subr.mxu0 0.0
        %1070 = vmatpush2.msra.mxu0 0.0
        %1071 = vmatprep.subr.mxu0 0.0
        %1072 = vmatpush2.msra.mxu0 0.0
        %1073 = vmatprep.subr.mxu0 0.0
        %1074 = vmatpush2.msra.mxu0 0.0
        %1075 = vmatprep.mubr.f32.mxu0 0.0
        %1076 = vmatmul.mubr.f32.gmra.mxu0 %v1009
        %v1077 = vpop.f32.mrf.mxu0
        %v1078 = vadd.f32 %v1006, %v1077
        %v1079 = vpop.f32.mrf.mxu0
        %1080 = vdwg.mxu0
        %v1081 = vmax.f32 %v1078, 0.0
        %v1082 = vrot.slane %v1081, 1
        %v1083 = vmax.f32 %v1081, %v1082
        %1084 = vst.msk [vmem:[#allocation2] sm:$0xff] %vm861, %v1083
        %v1085 = vld [vmem:[#allocation2] ss:$2 sm:$0xf]
        %v1086 = vand.u32 %v212, 3
        %vm1087 = vcmp.ne.s32.totalorder %v1086, 0
        %vm1088 = vcmask 1047556
        %v1089 = vrot.slane %v1085, 4
        %v1090 = vsel %vm1088, %v1089, %v1085
        %v1091 = vrot.slane %v1090, 4
        %v1092 = vsel %vm1088, %v1091, %v1085
        %v1093 = vsel %vm1087, 1, 0
        %vm1094 = vcmp.eq.s32.totalorder %v1093, 1
        %v1096 = vrot.slane %v1092, 3
        %v1098 = vsel %vm1094, %v1096, 0.0
        %vm1099 = vcmp.ne.s32.totalorder %v1086, 3
        %v1100 = vsel %vm1099, 1, 0
        %vm1101 = vcmp.eq.s32.totalorder %v1100, 1
        %v1102 = vrot.slane %v1092, 1
        %v1104 = vsel %vm1101, %v1102, 0.0
        %1106 = vrot.lane.b32.xlu0 %v1085, 32
        %v1107 = vpop.permute.xlu0 %1106
        %1110 = vrot.lane.b32.xlu0 %v1104, 64
        %v1111 = vpop.permute.xlu0 %1110
        %v1113 = vsel %vm861, %v1098, %v1107
        %v1114 = vsel %vm988, %v1113, %v1111
        %v1115 = vld [vmem:[#allocation3 + $0xd8] sm:$0xff]
        %v1116 = vld [vmem:[#allocation3 + $0xe0] sm:$0xff]
        %v1117 = vld [vmem:[#allocation3 + $0xe8] sm:$0xff]
        %v1118 = vld [vmem:[#allocation3 + $0xf0] sm:$0xff]
        %v1119 = vld [vmem:[#allocation3 + $0xf8] sm:$0xff]
        %v1120 = vld [vmem:[#allocation3 + $0x100] sm:$0xff]
        %v1121 = vld [vmem:[#allocation3 + $0x108] sm:$0xff]
        %v1122 = vld [vmem:[#allocation3 + $0x110] sm:$0xff]
        %v1123 = vld [vmem:[#allocation3 + $0x118] sm:$0xff]
        %v1124 = vld [vmem:[#allocation3 + $0x120] sm:$0xff]
        %v1125 = vld [vmem:[#allocation3 + $0x128] sm:$0xff]
        %v1126 = vld [vmem:[#allocation3 + $0x130] sm:$0xff]
        %v1127 = vld [vmem:[#allocation3 + $0x138] sm:$0x1]
        %v1128 = vlaneseq
        %v1129 = vshrl.u32 %v1128, 7
        %v1130 = vsub.s32 0, %v1129
        %v1131 = vrot.slane %v1127, %v1130
        %v1133 = vsel %vm1007, %v1114, 0
        %1135 = vmatprep.subr.mxu0 0.0
        %1136 = vmatpush1.msra.mxu0 0.0
        %1137 = vmatprep.subr.mxu0 0.0
        %1138 = vmatpush1.msra.mxu0 0.0
        %1139 = vmatprep.subr.mxu0 0.0
        %1140 = vmatpush1.msra.mxu0 0.0
        %1141 = vmatprep.subr.mxu0 0.0
        %1142 = vmatpush1.msra.mxu0 0.0
        %1143 = vmatprep.subr.mxu0 0.0
        %1144 = vmatpush1.msra.mxu0 %v1126
        %1145 = vmatprep.subr.mxu0 0.0
        %1146 = vmatpush1.msra.mxu0 %v1125
        %1147 = vmatprep.subr.mxu0 0.0
        %1148 = vmatpush1.msra.mxu0 %v1124
        %1149 = vmatprep.subr.mxu0 0.0
        %1150 = vmatpush1.msra.mxu0 %v1123
        %1151 = vmatprep.subr.mxu0 0.0
        %1152 = vmatpush1.msra.mxu0 %v1122
        %1153 = vmatprep.subr.mxu0 0.0
        %1154 = vmatpush1.msra.mxu0 %v1121
        %1155 = vmatprep.subr.mxu0 0.0
        %1156 = vmatpush1.msra.mxu0 %v1120
        %1157 = vmatprep.subr.mxu0 0.0
        %1158 = vmatpush1.msra.mxu0 %v1119
        %1159 = vmatprep.subr.mxu0 0.0
        %1160 = vmatpush1.msra.mxu0 %v1118
        %1161 = vmatprep.subr.mxu0 0.0
        %1162 = vmatpush1.msra.mxu0 %v1117
        %1163 = vmatprep.subr.mxu0 0.0
        %1164 = vmatpush1.msra.mxu0 %v1116
        %1165 = vmatprep.subr.mxu0 0.0
        %1166 = vmatpush1.msra.mxu0 %v1115
        %1167 = vmatprep.subr.mxu0 0.0
        %1168 = vmatpush2.msra.mxu0 0.0
        %1169 = vmatprep.subr.mxu0 0.0
        %1170 = vmatpush2.msra.mxu0 0.0
        %1171 = vmatprep.subr.mxu0 0.0
        %1172 = vmatpush2.msra.mxu0 0.0
        %1173 = vmatprep.subr.mxu0 0.0
        %1174 = vmatpush2.msra.mxu0 0.0
        %1175 = vmatprep.subr.mxu0 0.0
        %1176 = vmatpush2.msra.mxu0 0.0
        %1177 = vmatprep.subr.mxu0 0.0
        %1178 = vmatpush2.msra.mxu0 0.0
        %1179 = vmatprep.subr.mxu0 0.0
        %1180 = vmatpush2.msra.mxu0 0.0
        %1181 = vmatprep.subr.mxu0 0.0
        %1182 = vmatpush2.msra.mxu0 0.0
        %1183 = vmatprep.subr.mxu0 0.0
        %1184 = vmatpush2.msra.mxu0 0.0
        %1185 = vmatprep.subr.mxu0 0.0
        %1186 = vmatpush2.msra.mxu0 0.0
        %1187 = vmatprep.subr.mxu0 0.0
        %1188 = vmatpush2.msra.mxu0 0.0
        %1189 = vmatprep.subr.mxu0 0.0
        %1190 = vmatpush2.msra.mxu0 0.0
        %1191 = vmatprep.subr.mxu0 0.0
        %1192 = vmatpush2.msra.mxu0 0.0
        %1193 = vmatprep.subr.mxu0 0.0
        %1194 = vmatpush2.msra.mxu0 0.0
        %1195 = vmatprep.subr.mxu0 0.0
        %1196 = vmatpush2.msra.mxu0 0.0
        %1197 = vmatprep.subr.mxu0 0.0
        %1198 = vmatpush2.msra.mxu0 0.0
        %1199 = vmatprep.mubr.f32.mxu0 0.0
        %1200 = vmatmul.mubr.f32.gmra.mxu0 %v1133
        %v1201 = vpop.f32.mrf.mxu0
        %v1202 = vadd.f32 %v1131, %v1201
        %v1203 = vpop.f32.mrf.mxu0
        %1204 = vdwg.mxu0
        %v1205 = vlaneseq
        %v1206 = vand.u32 %v1205, 127
        %vm1207 = vcmp.eq.s32.totalorder %v1086, %v1206
        %1209 = vset.pattern.permute.xlu0 0
        %1210 = vperm.xlu0 %1209, %v1202
        %v1211 = vpop.permute.xlu0 %1210
        %v1213 = vsel %vm1207, %v1211, 0.0
        %v1214 = vmul.u32 %v212, 4
        %vm1215 = vcmp.ge.s32.totalorder %v1206, %v1214
        %v1216 = vadd.s32 %v212, 1
        %v1217 = vmul.u32 %v1216, 4
        %vm1218 = vcmp.lt.s32.totalorder %v1206, %v1217
        %vm1219 = vmand %vm1215, %vm1218
        %v1220 = vsel %vm1219, 1, 0
        %v1221 = vcvt.s32.f32 %v1220
        %v1222 = vld [vmem:[#allocation3 + $0x1b0] sm:$0xff]
        %v1223 = vld [vmem:[#allocation3 + $0x1b8] sm:$0xff]
        %v1224 = vld [vmem:[#allocation3 + $0x1c0] sm:$0xff]
        %v1225 = vld [vmem:[#allocation3 + $0x1c8] sm:$0xff]
        %v1226 = vld [vmem:[#allocation3 + $0x1d0] sm:$0xff]
        %v1227 = vld [vmem:[#allocation3 + $0x1d8] sm:$0xff]
        %v1228 = vld [vmem:[#allocation3 + $0x1e0] sm:$0xff]
        %v1229 = vld [vmem:[#allocation3 + $0x1e8] sm:$0xff]
        %v1230 = vld [vmem:[#allocation3 + $0x1f0] sm:$0xff]
        %v1231 = vld [vmem:[#allocation3 + $0x1f8] sm:$0xff]
        %v1232 = vld [vmem:[#allocation3 + $0x200] sm:$0xff]
        %v1233 = vld [vmem:[#allocation3 + $0x208] sm:$0xff]
        %v1234 = vld [vmem:[#allocation3 + $0x210] sm:$0xff]
        %v1235 = vld [vmem:[#allocation3 + $0x218] sm:$0xff]
        %v1236 = vld [vmem:[#allocation3 + $0x220] sm:$0xff]
        %v1237 = vld [vmem:[#allocation3 + $0x228] sm:$0xff]
        %v1238 = vld [vmem:[#allocation3 + $0x230] sm:$0xff]
        %v1239 = vld [vmem:[#allocation3 + $0x238] sm:$0xff]
        %v1240 = vld [vmem:[#allocation3 + $0x240] sm:$0xff]
        %v1241 = vld [vmem:[#allocation3 + $0x248] sm:$0xff]
        %v1242 = vld [vmem:[#allocation3 + $0x250] sm:$0xff]
        %v1243 = vld [vmem:[#allocation3 + $0x258] sm:$0xff]
        %v1244 = vld [vmem:[#allocation3 + $0x260] sm:$0xff]
        %v1245 = vld [vmem:[#allocation3 + $0x268] sm:$0xff]
        %v1246 = vld [vmem:[#allocation3 + $0x270] sm:$0xff]
        %v1247 = vld [vmem:[#allocation3 + $0x278] sm:$0xff]
        %v1248 = vld [vmem:[#allocation3 + $0x280] sm:$0xff]
        %v1249 = vld [vmem:[#allocation3 + $0x288] sm:$0xff]
        %v1250 = vld [vmem:[#allocation3 + $0x290] sm:$0xff]
        %v1251 = vld [vmem:[#allocation3 + $0x298] sm:$0xff]
        %v1252 = vld [vmem:[#allocation3 + $0x2a0] sm:$0xff]
        %v1253 = vld [vmem:[#allocation3 + $0x2a8] sm:$0xff]
        %v1254 = vld [vmem:[#allocation3 + $0x2b0] sm:$0x1]
        %v1256 = vlaneseq
        %v1257 = vshrl.u32 %v1256, 7
        %v1258 = vsub.s32 0, %v1257
        %v1259 = vrot.slane %v210, %v1258
        %v1260 = vlaneseq
        %v1261 = vshrl.u32 %v1260, 7
        %v1262 = vsub.s32 1, %v1261
        %v1263 = vrot.slane %v210, %v1262
        %1266 = vmatprep.subr.mxu0 0.0
        %1267 = vmatpush1.msra.mxu0 %v1237
        %1268 = vmatprep.subr.mxu0 0.0
        %1269 = vmatpush1.msra.mxu0 %v1236
        %1270 = vmatprep.subr.mxu0 0.0
        %1271 = vmatpush1.msra.mxu0 %v1235
        %1272 = vmatprep.subr.mxu0 0.0
        %1273 = vmatpush1.msra.mxu0 %v1234
        %1274 = vmatprep.subr.mxu0 0.0
        %1275 = vmatpush1.msra.mxu0 %v1233
        %1276 = vmatprep.subr.mxu0 0.0
        %1277 = vmatpush1.msra.mxu0 %v1232
        %1278 = vmatprep.subr.mxu0 0.0
        %1279 = vmatpush1.msra.mxu0 %v1231
        %1280 = vmatprep.subr.mxu0 0.0
        %1281 = vmatpush1.msra.mxu0 %v1230
        %1282 = vmatprep.subr.mxu0 0.0
        %1283 = vmatpush1.msra.mxu0 %v1229
        %1284 = vmatprep.subr.mxu0 0.0
        %1285 = vmatpush1.msra.mxu0 %v1228
        %1286 = vmatprep.subr.mxu0 0.0
        %1287 = vmatpush1.msra.mxu0 %v1227
        %1288 = vmatprep.subr.mxu0 0.0
        %1289 = vmatpush1.msra.mxu0 %v1226
        %1290 = vmatprep.subr.mxu0 0.0
        %1291 = vmatpush1.msra.mxu0 %v1225
        %1292 = vmatprep.subr.mxu0 0.0
        %1293 = vmatpush1.msra.mxu0 %v1224
        %1294 = vmatprep.subr.mxu0 0.0
        %1295 = vmatpush1.msra.mxu0 %v1223
        %1296 = vmatprep.subr.mxu0 0.0
        %1297 = vmatpush1.msra.mxu0 %v1222
        %1298 = vmatprep.subr.mxu0 0.0
        %1299 = vmatpush2.msra.mxu0 %v1253
        %1300 = vmatprep.subr.mxu0 0.0
        %1301 = vmatpush2.msra.mxu0 %v1252
        %1302 = vmatprep.subr.mxu0 0.0
        %1303 = vmatpush2.msra.mxu0 %v1251
        %1304 = vmatprep.subr.mxu0 0.0
        %1305 = vmatpush2.msra.mxu0 %v1250
        %1306 = vmatprep.subr.mxu0 0.0
        %1307 = vmatpush2.msra.mxu0 %v1249
        %1308 = vmatprep.subr.mxu0 0.0
        %1309 = vmatpush2.msra.mxu0 %v1248
        %1310 = vmatprep.subr.mxu0 0.0
        %1311 = vmatpush2.msra.mxu0 %v1247
        %1312 = vmatprep.subr.mxu0 0.0
        %1313 = vmatpush2.msra.mxu0 %v1246
        %1314 = vmatprep.subr.mxu0 0.0
        %1315 = vmatpush2.msra.mxu0 %v1245
        %1316 = vmatprep.subr.mxu0 0.0
        %1317 = vmatpush2.msra.mxu0 %v1244
        %1318 = vmatprep.subr.mxu0 0.0
        %1319 = vmatpush2.msra.mxu0 %v1243
        %1320 = vmatprep.subr.mxu0 0.0
        %1321 = vmatpush2.msra.mxu0 %v1242
        %1322 = vmatprep.subr.mxu0 0.0
        %1323 = vmatpush2.msra.mxu0 %v1241
        %1324 = vmatprep.subr.mxu0 0.0
        %1325 = vmatpush2.msra.mxu0 %v1240
        %1326 = vmatprep.subr.mxu0 0.0
        %1327 = vmatpush2.msra.mxu0 %v1239
        %1328 = vmatprep.subr.mxu0 0.0
        %1329 = vmatpush2.msra.mxu0 %v1238
        %1330 = vmatprep.mubr.f32.mxu0 %v1263
        %1331 = vmatmul.mubr.f32.gmra.mxu0 %v1259
        %v1332 = vpop.f32.mrf.mxu0
        %v1333 = vadd.f32 %v1254, %v1332
        %v1334 = vpop.f32.mrf.mxu0
        %1335 = vdwg.mxu0
        %v1336 = vmax.f32 %v1333, 0.0
        %v1337 = vld [vmem:[#allocation3 + $0x2b8] sm:$0xff]
        %v1338 = vld [vmem:[#allocation3 + $0x2c0] sm:$0xff]
        %v1339 = vld [vmem:[#allocation3 + $0x2c8] sm:$0xff]
        %v1340 = vld [vmem:[#allocation3 + $0x2d0] sm:$0xff]
        %v1341 = vld [vmem:[#allocation3 + $0x2d8] sm:$0xff]
        %v1342 = vld [vmem:[#allocation3 + $0x2e0] sm:$0xff]
        %v1343 = vld [vmem:[#allocation3 + $0x2e8] sm:$0xff]
        %v1344 = vld [vmem:[#allocation3 + $0x2f0] sm:$0xff]
        %v1345 = vld [vmem:[#allocation3 + $0x2f8] sm:$0x1]
        %v1347 = vsel %vm988, %v1336, 0
        %1349 = vmatprep.subr.mxu0 0.0
        %1350 = vmatpush1.msra.mxu0 0.0
        %1351 = vmatprep.subr.mxu0 0.0
        %1352 = vmatpush1.msra.mxu0 0.0
        %1353 = vmatprep.subr.mxu0 0.0
        %1354 = vmatpush1.msra.mxu0 0.0
        %1355 = vmatprep.subr.mxu0 0.0
        %1356 = vmatpush1.msra.mxu0 0.0
        %1357 = vmatprep.subr.mxu0 0.0
        %1358 = vmatpush1.msra.mxu0 0.0
        %1359 = vmatprep.subr.mxu0 0.0
        %1360 = vmatpush1.msra.mxu0 0.0
        %1361 = vmatprep.subr.mxu0 0.0
        %1362 = vmatpush1.msra.mxu0 0.0
        %1363 = vmatprep.subr.mxu0 0.0
        %1364 = vmatpush1.msra.mxu0 0.0
        %1365 = vmatprep.subr.mxu0 0.0
        %1366 = vmatpush1.msra.mxu0 %v1344
        %1367 = vmatprep.subr.mxu0 0.0
        %1368 = vmatpush1.msra.mxu0 %v1343
        %1369 = vmatprep.subr.mxu0 0.0
        %1370 = vmatpush1.msra.mxu0 %v1342
        %1371 = vmatprep.subr.mxu0 0.0
        %1372 = vmatpush1.msra.mxu0 %v1341
        %1373 = vmatprep.subr.mxu0 0.0
        %1374 = vmatpush1.msra.mxu0 %v1340
        %1375 = vmatprep.subr.mxu0 0.0
        %1376 = vmatpush1.msra.mxu0 %v1339
        %1377 = vmatprep.subr.mxu0 0.0
        %1378 = vmatpush1.msra.mxu0 %v1338
        %1379 = vmatprep.subr.mxu0 0.0
        %1380 = vmatpush1.msra.mxu0 %v1337
        %1381 = vmatprep.subr.mxu0 0.0
        %1382 = vmatpush2.msra.mxu0 0.0
        %1383 = vmatprep.subr.mxu0 0.0
        %1384 = vmatpush2.msra.mxu0 0.0
        %1385 = vmatprep.subr.mxu0 0.0
        %1386 = vmatpush2.msra.mxu0 0.0
        %1387 = vmatprep.subr.mxu0 0.0
        %1388 = vmatpush2.msra.mxu0 0.0
        %1389 = vmatprep.subr.mxu0 0.0
        %1390 = vmatpush2.msra.mxu0 0.0
        %1391 = vmatprep.subr.mxu0 0.0
        %1392 = vmatpush2.msra.mxu0 0.0
        %1393 = vmatprep.subr.mxu0 0.0
        %1394 = vmatpush2.msra.mxu0 0.0
        %1395 = vmatprep.subr.mxu0 0.0
        %1396 = vmatpush2.msra.mxu0 0.0
        %1397 = vmatprep.subr.mxu0 0.0
        %1398 = vmatpush2.msra.mxu0 0.0
        %1399 = vmatprep.subr.mxu0 0.0
        %1400 = vmatpush2.msra.mxu0 0.0
        %1401 = vmatprep.subr.mxu0 0.0
        %1402 = vmatpush2.msra.mxu0 0.0
        %1403 = vmatprep.subr.mxu0 0.0
        %1404 = vmatpush2.msra.mxu0 0.0
        %1405 = vmatprep.subr.mxu0 0.0
        %1406 = vmatpush2.msra.mxu0 0.0
        %1407 = vmatprep.subr.mxu0 0.0
        %1408 = vmatpush2.msra.mxu0 0.0
        %1409 = vmatprep.subr.mxu0 0.0
        %1410 = vmatpush2.msra.mxu0 0.0
        %1411 = vmatprep.subr.mxu0 0.0
        %1412 = vmatpush2.msra.mxu0 0.0
        %1413 = vmatprep.mubr.f32.mxu0 0.0
        %1414 = vmatmul.mubr.f32.gmra.mxu0 %v1347
        %v1415 = vpop.f32.mrf.mxu0
        %v1416 = vadd.f32 %v1345, %v1415
        %v1417 = vpop.f32.mrf.mxu0
        %1418 = vdwg.mxu0
        %v1419 = vmax.f32 %v1416, 0.0
        %v1420 = vld [vmem:[#allocation3 + $0x300] sm:$0xff]
        %v1421 = vld [vmem:[#allocation3 + $0x308] sm:$0xff]
        %v1422 = vld [vmem:[#allocation3 + $0x310] sm:$0x1]
        %v1424 = vsel %vm684, %v1419, 0
        %1426 = vmatprep.subr.mxu0 0.0
        %1427 = vmatpush1.msra.mxu0 0.0
        %1428 = vmatprep.subr.mxu0 0.0
        %1429 = vmatpush1.msra.mxu0 0.0
        %1430 = vmatprep.subr.mxu0 0.0
        %1431 = vmatpush1.msra.mxu0 0.0
        %1432 = vmatprep.subr.mxu0 0.0
        %1433 = vmatpush1.msra.mxu0 0.0
        %1434 = vmatprep.subr.mxu0 0.0
        %1435 = vmatpush1.msra.mxu0 0.0
        %1436 = vmatprep.subr.mxu0 0.0
        %1437 = vmatpush1.msra.mxu0 0.0
        %1438 = vmatprep.subr.mxu0 0.0
        %1439 = vmatpush1.msra.mxu0 0.0
        %1440 = vmatprep.subr.mxu0 0.0
        %1441 = vmatpush1.msra.mxu0 0.0
        %1442 = vmatprep.subr.mxu0 0.0
        %1443 = vmatpush1.msra.mxu0 0.0
        %1444 = vmatprep.subr.mxu0 0.0
        %1445 = vmatpush1.msra.mxu0 0.0
        %1446 = vmatprep.subr.mxu0 0.0
        %1447 = vmatpush1.msra.mxu0 0.0
        %1448 = vmatprep.subr.mxu0 0.0
        %1449 = vmatpush1.msra.mxu0 0.0
        %1450 = vmatprep.subr.mxu0 0.0
        %1451 = vmatpush1.msra.mxu0 0.0
        %1452 = vmatprep.subr.mxu0 0.0
        %1453 = vmatpush1.msra.mxu0 0.0
        %1454 = vmatprep.subr.mxu0 0.0
        %1455 = vmatpush1.msra.mxu0 %v1421
        %1456 = vmatprep.subr.mxu0 0.0
        %1457 = vmatpush1.msra.mxu0 %v1420
        %1458 = vmatprep.subr.mxu0 0.0
        %1459 = vmatpush2.msra.mxu0 0.0
        %1460 = vmatprep.subr.mxu0 0.0
        %1461 = vmatpush2.msra.mxu0 0.0
        %1462 = vmatprep.subr.mxu0 0.0
        %1463 = vmatpush2.msra.mxu0 0.0
        %1464 = vmatprep.subr.mxu0 0.0
        %1465 = vmatpush2.msra.mxu0 0.0
        %1466 = vmatprep.subr.mxu0 0.0
        %1467 = vmatpush2.msra.mxu0 0.0
        %1468 = vmatprep.subr.mxu0 0.0
        %1469 = vmatpush2.msra.mxu0 0.0
        %1470 = vmatprep.subr.mxu0 0.0
        %1471 = vmatpush2.msra.mxu0 0.0
        %1472 = vmatprep.subr.mxu0 0.0
        %1473 = vmatpush2.msra.mxu0 0.0
        %1474 = vmatprep.subr.mxu0 0.0
        %1475 = vmatpush2.msra.mxu0 0.0
        %1476 = vmatprep.subr.mxu0 0.0
        %1477 = vmatpush2.msra.mxu0 0.0
        %1478 = vmatprep.subr.mxu0 0.0
        %1479 = vmatpush2.msra.mxu0 0.0
        %1480 = vmatprep.subr.mxu0 0.0
        %1481 = vmatpush2.msra.mxu0 0.0
        %1482 = vmatprep.subr.mxu0 0.0
        %1483 = vmatpush2.msra.mxu0 0.0
        %1484 = vmatprep.subr.mxu0 0.0
        %1485 = vmatpush2.msra.mxu0 0.0
        %1486 = vmatprep.subr.mxu0 0.0
        %1487 = vmatpush2.msra.mxu0 0.0
        %1488 = vmatprep.subr.mxu0 0.0
        %1489 = vmatpush2.msra.mxu0 0.0
        %1490 = vmatprep.mubr.f32.mxu0 0.0
        %1491 = vmatmul.mubr.f32.gmra.mxu0 %v1424
        %v1492 = vpop.f32.mrf.mxu0
        %v1493 = vadd.f32 %v1422, %v1492
        %v1494 = vpop.f32.mrf.mxu0
        %1495 = vdwg.mxu0
        %v1496 = vld [vmem:[#allocation3 + $0x140] sm:$0xff]
        %v1497 = vld [vmem:[#allocation3 + $0x148] sm:$0xf]
        %v1498 = vld [vmem:[#allocation3 + $0x150] sm:$0x1]
        %v1499 = vlaneseq
        %v1500 = vshrl.u32 %v1499, 7
        %v1501 = vsub.s32 0, %v1500
        %v1502 = vrot.slane %v1498, %v1501
        %v1504 = vsel %vm440, %v1497, 0
        %1506 = vmatprep.subr.mxu0 0.0
        %1507 = vmatpush1.msra.mxu0 0.0
        %1508 = vmatprep.subr.mxu0 0.0
        %1509 = vmatpush1.msra.mxu0 0.0
        %1510 = vmatprep.subr.mxu0 0.0
        %1511 = vmatpush1.msra.mxu0 0.0
        %1512 = vmatprep.subr.mxu0 0.0
        %1513 = vmatpush1.msra.mxu0 0.0
        %1514 = vmatprep.subr.mxu0 0.0
        %1515 = vmatpush1.msra.mxu0 0.0
        %1516 = vmatprep.subr.mxu0 0.0
        %1517 = vmatpush1.msra.mxu0 0.0
        %1518 = vmatprep.subr.mxu0 0.0
        %1519 = vmatpush1.msra.mxu0 0.0
        %1520 = vmatprep.subr.mxu0 0.0
        %1521 = vmatpush1.msra.mxu0 0.0
        %1522 = vmatprep.subr.mxu0 0.0
        %1523 = vmatpush1.msra.mxu0 0.0
        %1524 = vmatprep.subr.mxu0 0.0
        %1525 = vmatpush1.msra.mxu0 0.0
        %1526 = vmatprep.subr.mxu0 0.0
        %1527 = vmatpush1.msra.mxu0 0.0
        %1528 = vmatprep.subr.mxu0 0.0
        %1529 = vmatpush1.msra.mxu0 0.0
        %1530 = vmatprep.subr.mxu0 0.0
        %1531 = vmatpush1.msra.mxu0 0.0
        %1532 = vmatprep.subr.mxu0 0.0
        %1533 = vmatpush1.msra.mxu0 0.0
        %1534 = vmatprep.subr.mxu0 0.0
        %1535 = vmatpush1.msra.mxu0 %v1504
        %1536 = vmatprep.subr.mxu0 0.0
        %1537 = vmatpush1.msra.mxu0 %v1496
        %1538 = vmatprep.subr.mxu0 0.0
        %1539 = vmatpush2.msra.mxu0 0.0
        %1540 = vmatprep.subr.mxu0 0.0
        %1541 = vmatpush2.msra.mxu0 0.0
        %1542 = vmatprep.subr.mxu0 0.0
        %1543 = vmatpush2.msra.mxu0 0.0
        %1544 = vmatprep.subr.mxu0 0.0
        %1545 = vmatpush2.msra.mxu0 0.0
        %1546 = vmatprep.subr.mxu0 0.0
        %1547 = vmatpush2.msra.mxu0 0.0
        %1548 = vmatprep.subr.mxu0 0.0
        %1549 = vmatpush2.msra.mxu0 0.0
        %1550 = vmatprep.subr.mxu0 0.0
        %1551 = vmatpush2.msra.mxu0 0.0
        %1552 = vmatprep.subr.mxu0 0.0
        %1553 = vmatpush2.msra.mxu0 0.0
        %1554 = vmatprep.subr.mxu0 0.0
        %1555 = vmatpush2.msra.mxu0 0.0
        %1556 = vmatprep.subr.mxu0 0.0
        %1557 = vmatpush2.msra.mxu0 0.0
        %1558 = vmatprep.subr.mxu0 0.0
        %1559 = vmatpush2.msra.mxu0 0.0
        %1560 = vmatprep.subr.mxu0 0.0
        %1561 = vmatpush2.msra.mxu0 0.0
        %1562 = vmatprep.subr.mxu0 0.0
        %1563 = vmatpush2.msra.mxu0 0.0
        %1564 = vmatprep.subr.mxu0 0.0
        %1565 = vmatpush2.msra.mxu0 0.0
        %1566 = vmatprep.subr.mxu0 0.0
        %1567 = vmatpush2.msra.mxu0 0.0
        %1568 = vmatprep.subr.mxu0 0.0
        %1569 = vmatpush2.msra.mxu0 0.0
        %1570 = vmatprep.mubr.f32.mxu0 0.0
        %1571 = vmatmul.mubr.f32.gmra.mxu0 %v417
        %v1572 = vpop.f32.mrf.mxu0
        %v1573 = vadd.f32 %v1502, %v1572
        %v1574 = vpop.f32.mrf.mxu0
        %1575 = vmatprep.mubr.f32.mxu0 0.0
        %1576 = vmatmul.mubr.f32.gmra.mxu0 %v420
        %v1577 = vpop.f32.mrf.mxu0
        %v1578 = vadd.f32 %v1502, %v1577
        %v1579 = vpop.f32.mrf.mxu0
        %1580 = vmatprep.mubr.f32.mxu0 0.0
        %1581 = vmatmul.mubr.f32.gmra.mxu0 %v423
        %v1582 = vpop.f32.mrf.mxu0
        %v1583 = vadd.f32 %v1502, %v1582
        %v1584 = vpop.f32.mrf.mxu0
        %1585 = vmatprep.mubr.f32.mxu0 0.0
        %1586 = vmatmul.mubr.f32.gmra.mxu0 %v426
        %v1587 = vpop.f32.mrf.mxu0
        %v1588 = vadd.f32 %v1502, %v1587
        %v1589 = vpop.f32.mrf.mxu0
        %1590 = vmatprep.mubr.f32.mxu0 0.0
        %1591 = vmatmul.mubr.f32.gmra.mxu0 %v429
        %v1592 = vpop.f32.mrf.mxu0
        %v1593 = vadd.f32 %v1502, %v1592
        %v1594 = vpop.f32.mrf.mxu0
        %1595 = vmatprep.mubr.f32.mxu0 0.0
        %1596 = vmatmul.mubr.f32.gmra.mxu0 %v432
        %v1597 = vpop.f32.mrf.mxu0
        %v1598 = vadd.f32 %v1502, %v1597
        %v1599 = vpop.f32.mrf.mxu0
        %1600 = vmatprep.mubr.f32.mxu0 0.0
        %1601 = vmatmul.mubr.f32.gmra.mxu0 %v435
        %v1602 = vpop.f32.mrf.mxu0
        %v1603 = vadd.f32 %v1502, %v1602
        %v1604 = vpop.f32.mrf.mxu0
        %1605 = vmatprep.mubr.f32.mxu0 0.0
        %1606 = vmatmul.mubr.f32.gmra.mxu0 %v438
        %v1607 = vpop.f32.mrf.mxu0
        %v1608 = vadd.f32 %v1502, %v1607
        %v1609 = vpop.f32.mrf.mxu0
        %1610 = vdwg.mxu0
        %v1611 = vmax.f32 %v1573, 0.0
        %v1612 = vmax.f32 %v1578, 0.0
        %v1613 = vmax.f32 %v1583, 0.0
        %v1614 = vmax.f32 %v1588, 0.0
        %v1615 = vmax.f32 %v1593, 0.0
        %v1616 = vmax.f32 %v1598, 0.0
        %v1617 = vmax.f32 %v1603, 0.0
        %v1618 = vmax.f32 %v1608, 0.0
        %v1619 = vrot.slane %v1611, 1
        %v1620 = vrot.slane %v1612, 1
        %v1621 = vrot.slane %v1613, 1
        %v1622 = vrot.slane %v1614, 1
        %v1623 = vrot.slane %v1615, 1
        %v1624 = vrot.slane %v1616, 1
        %v1625 = vrot.slane %v1617, 1
        %v1626 = vrot.slane %v1618, 1
        %v1627 = vsel %vm293, %v1625, %v1626
        %v1628 = vsel %vm293, %v1624, %v1625
        %v1629 = vsel %vm293, %v1623, %v1624
        %v1630 = vsel %vm293, %v1622, %v1623
        %v1631 = vsel %vm293, %v1621, %v1622
        %v1632 = vsel %vm293, %v1620, %v1621
        %v1633 = vsel %vm293, %v1619, %v1620
        %v1634 = vsel %vm293, %v1626, %v1619
        %v1635 = vmax.f32 %v1611, %v1633
        %v1636 = vmax.f32 %v1612, %v1632
        %v1637 = vmax.f32 %v1613, %v1631
        %v1638 = vmax.f32 %v1614, %v1630
        %v1639 = vmax.f32 %v1615, %v1629
        %v1640 = vmax.f32 %v1616, %v1628
        %v1641 = vmax.f32 %v1617, %v1627
        %v1642 = vmax.f32 %v1618, %v1634
        %1643 = vst.msk [vmem:[#allocation2] sm:$0xff] %vm399, %v1635
        %1644 = vst.msk [vmem:[#allocation2 + $0x8] sm:$0xff] %vm399, %v1636
        %1645 = vst.msk [vmem:[#allocation2 + $0x10] sm:$0xff] %vm399, %v1637
        %1646 = vst.msk [vmem:[#allocation2 + $0x18] sm:$0xff] %vm399, %v1638
        %1647 = vst.msk [vmem:[#allocation2 + $0x20] sm:$0xff] %vm399, %v1639
        %1648 = vst.msk [vmem:[#allocation2 + $0x28] sm:$0xff] %vm399, %v1640
        %1649 = vst.msk [vmem:[#allocation2 + $0x30] sm:$0xff] %vm399, %v1641
        %1650 = vst.msk [vmem:[#allocation2 + $0x38] sm:$0xff] %vm399, %v1642
        %v1651 = vld [vmem:[#allocation2] ss:$2 sm:$0xff]
        %v1652 = vld [vmem:[%s590] ss:$2 sm:$0xff]
        %v1653 = vld [vmem:[%s592] ss:$2 sm:$0xff]
        %v1654 = vld [vmem:[%s594] ss:$2 sm:$0xff]
        %v1655 = vrot.slane %v1651, 7
        %v1656 = vrot.slane %v1652, 7
        %v1657 = vrot.slane %v1653, 7
        %v1658 = vrot.slane %v1654, 7
        %v1659 = vsel %vm244, %v1657, %v1658
        %v1660 = vsel %vm244, %v1656, %v1657
        %v1661 = vsel %vm244, %v1655, %v1656
        %v1662 = vsel %vm244, %v1658, %v1655
        %v1663 = vsel %vm616, %v1662, 0.0
        %v1664 = vsel %vm617, %v1661, 0.0
        %v1665 = vsel %vm618, %v1660, 0.0
        %v1666 = vsel %vm619, %v1659, 0.0
        %v1667 = vrot.slane %v1651, 1
        %v1668 = vrot.slane %v1652, 1
        %v1669 = vrot.slane %v1653, 1
        %v1670 = vrot.slane %v1654, 1
        %v1671 = vsel %vm293, %v1669, %v1670
        %v1672 = vsel %vm293, %v1668, %v1669
        %v1673 = vsel %vm293, %v1667, %v1668
        %v1674 = vsel %vm293, %v1670, %v1667
        %v1675 = vsel %vm640, %v1673, 0.0
        %v1676 = vsel %vm641, %v1672, 0.0
        %v1677 = vsel %vm642, %v1671, 0.0
        %v1678 = vsel %vm643, %v1674, 0.0
        %1683 = vrot.lane.b32.xlu0 %v1651, 8
        %v1684 = vpop.permute.xlu0 %1683
        %1685 = vrot.lane.b32.xlu0 %v1652, 8
        %v1686 = vpop.permute.xlu0 %1685
        %1687 = vrot.lane.b32.xlu0 %v1653, 8
        %v1688 = vpop.permute.xlu0 %1687
        %1689 = vrot.lane.b32.xlu0 %v1654, 8
        %v1690 = vpop.permute.xlu0 %1689
        %1699 = vrot.lane.b32.xlu0 %v1675, 16
        %v1700 = vpop.permute.xlu0 %1699
        %1701 = vrot.lane.b32.xlu0 %v1676, 16
        %v1702 = vpop.permute.xlu0 %1701
        %1703 = vrot.lane.b32.xlu0 %v1677, 16
        %v1704 = vpop.permute.xlu0 %1703
        %1705 = vrot.lane.b32.xlu0 %v1678, 16
        %v1706 = vpop.permute.xlu0 %1705
        %v1711 = vsel %vm399, %v1663, %v1684
        %v1712 = vsel %vm399, %v1664, %v1686
        %v1713 = vsel %vm399, %v1665, %v1688
        %v1714 = vsel %vm399, %v1666, %v1690
        %v1715 = vsel %vm684, %v1711, %v1700
        %v1716 = vsel %vm684, %v1712, %v1702
        %v1717 = vsel %vm684, %v1713, %v1704
        %v1718 = vsel %vm684, %v1714, %v1706
        %v1719 = vld [vmem:[#allocation3 + $0x158] sm:$0xff]
        %v1720 = vld [vmem:[#allocation3 + $0x160] sm:$0xff]
        %v1721 = vld [vmem:[#allocation3 + $0x168] sm:$0xff]
        %v1722 = vld [vmem:[#allocation3 + $0x170] sm:$0x1]
        %v1723 = vlaneseq
        %v1724 = vshrl.u32 %v1723, 7
        %v1725 = vsub.s32 0, %v1724
        %v1726 = vrot.slane %v1722, %v1725
        %v1728 = vsel %vm697, %v1715, 0
        %v1731 = vsel %vm697, %v1716, 0
        %v1734 = vsel %vm697, %v1717, 0
        %v1737 = vsel %vm697, %v1718, 0
        %1739 = vmatprep.subr.mxu0 0.0
        %1740 = vmatpush1.msra.mxu0 0.0
        %1741 = vmatprep.subr.mxu0 0.0
        %1742 = vmatpush1.msra.mxu0 0.0
        %1743 = vmatprep.subr.mxu0 0.0
        %1744 = vmatpush1.msra.mxu0 0.0
        %1745 = vmatprep.subr.mxu0 0.0
        %1746 = vmatpush1.msra.mxu0 0.0
        %1747 = vmatprep.subr.mxu0 0.0
        %1748 = vmatpush1.msra.mxu0 0.0
        %1749 = vmatprep.subr.mxu0 0.0
        %1750 = vmatpush1.msra.mxu0 0.0
        %1751 = vmatprep.subr.mxu0 0.0
        %1752 = vmatpush1.msra.mxu0 0.0
        %1753 = vmatprep.subr.mxu0 0.0
        %1754 = vmatpush1.msra.mxu0 0.0
        %1755 = vmatprep.subr.mxu0 0.0
        %1756 = vmatpush1.msra.mxu0 0.0
        %1757 = vmatprep.subr.mxu0 0.0
        %1758 = vmatpush1.msra.mxu0 0.0
        %1759 = vmatprep.subr.mxu0 0.0
        %1760 = vmatpush1.msra.mxu0 0.0
        %1761 = vmatprep.subr.mxu0 0.0
        %1762 = vmatpush1.msra.mxu0 0.0
        %1763 = vmatprep.subr.mxu0 0.0
        %1764 = vmatpush1.msra.mxu0 0.0
        %1765 = vmatprep.subr.mxu0 0.0
        %1766 = vmatpush1.msra.mxu0 %v1721
        %1767 = vmatprep.subr.mxu0 0.0
        %1768 = vmatpush1.msra.mxu0 %v1720
        %1769 = vmatprep.subr.mxu0 0.0
        %1770 = vmatpush1.msra.mxu0 %v1719
        %1771 = vmatprep.subr.mxu0 0.0
        %1772 = vmatpush2.msra.mxu0 0.0
        %1773 = vmatprep.subr.mxu0 0.0
        %1774 = vmatpush2.msra.mxu0 0.0
        %1775 = vmatprep.subr.mxu0 0.0
        %1776 = vmatpush2.msra.mxu0 0.0
        %1777 = vmatprep.subr.mxu0 0.0
        %1778 = vmatpush2.msra.mxu0 0.0
        %1779 = vmatprep.subr.mxu0 0.0
        %1780 = vmatpush2.msra.mxu0 0.0
        %1781 = vmatprep.subr.mxu0 0.0
        %1782 = vmatpush2.msra.mxu0 0.0
        %1783 = vmatprep.subr.mxu0 0.0
        %1784 = vmatpush2.msra.mxu0 0.0
        %1785 = vmatprep.subr.mxu0 0.0
        %1786 = vmatpush2.msra.mxu0 0.0
        %1787 = vmatprep.subr.mxu0 0.0
        %1788 = vmatpush2.msra.mxu0 0.0
        %1789 = vmatprep.subr.mxu0 0.0
        %1790 = vmatpush2.msra.mxu0 0.0
        %1791 = vmatprep.subr.mxu0 0.0
        %1792 = vmatpush2.msra.mxu0 0.0
        %1793 = vmatprep.subr.mxu0 0.0
        %1794 = vmatpush2.msra.mxu0 0.0
        %1795 = vmatprep.subr.mxu0 0.0
        %1796 = vmatpush2.msra.mxu0 0.0
        %1797 = vmatprep.subr.mxu0 0.0
        %1798 = vmatpush2.msra.mxu0 0.0
        %1799 = vmatprep.subr.mxu0 0.0
        %1800 = vmatpush2.msra.mxu0 0.0
        %1801 = vmatprep.subr.mxu0 0.0
        %1802 = vmatpush2.msra.mxu0 0.0
        %1803 = vmatprep.mubr.f32.mxu0 0.0
        %1804 = vmatmul.mubr.f32.gmra.mxu0 %v1728
        %v1805 = vpop.f32.mrf.mxu0
        %v1806 = vadd.f32 %v1726, %v1805
        %v1807 = vpop.f32.mrf.mxu0
        %1808 = vmatprep.mubr.f32.mxu0 0.0
        %1809 = vmatmul.mubr.f32.gmra.mxu0 %v1731
        %v1810 = vpop.f32.mrf.mxu0
        %v1811 = vadd.f32 %v1726, %v1810
        %v1812 = vpop.f32.mrf.mxu0
        %1813 = vmatprep.mubr.f32.mxu0 0.0
        %1814 = vmatmul.mubr.f32.gmra.mxu0 %v1734
        %v1815 = vpop.f32.mrf.mxu0
        %v1816 = vadd.f32 %v1726, %v1815
        %v1817 = vpop.f32.mrf.mxu0
        %1818 = vmatprep.mubr.f32.mxu0 0.0
        %1819 = vmatmul.mubr.f32.gmra.mxu0 %v1737
        %v1820 = vpop.f32.mrf.mxu0
        %v1821 = vadd.f32 %v1726, %v1820
        %v1822 = vpop.f32.mrf.mxu0
        %1823 = vdwg.mxu0
        %v1824 = vmax.f32 %v1806, 0.0
        %v1825 = vmax.f32 %v1811, 0.0
        %v1826 = vmax.f32 %v1816, 0.0
        %v1827 = vmax.f32 %v1821, 0.0
        %v1828 = vrot.slane %v1824, 1
        %v1829 = vrot.slane %v1825, 1
        %v1830 = vrot.slane %v1826, 1
        %v1831 = vrot.slane %v1827, 1
        %v1832 = vsel %vm293, %v1830, %v1831
        %v1833 = vsel %vm293, %v1829, %v1830
        %v1834 = vsel %vm293, %v1828, %v1829
        %v1835 = vsel %vm293, %v1831, %v1828
        %v1836 = vmax.f32 %v1824, %v1834
        %v1837 = vmax.f32 %v1825, %v1833
        %v1838 = vmax.f32 %v1826, %v1832
        %v1839 = vmax.f32 %v1827, %v1835
        %1840 = vst.msk [vmem:[#allocation2] sm:$0xff] %vm684, %v1836
        %1841 = vst.msk [vmem:[#allocation2 + $0x8] sm:$0xff] %vm684, %v1837
        %1842 = vst.msk [vmem:[#allocation2 + $0x10] sm:$0xff] %vm684, %v1838
        %1843 = vst.msk [vmem:[#allocation2 + $0x18] sm:$0xff] %vm684, %v1839
        %v1844 = vld [vmem:[#allocation2] ss:$2 sm:$0xff]
        %v1845 = vld [vmem:[%s590] ss:$2 sm:$0xff]
        %v1846 = vrot.slane %v1844, 7
        %v1847 = vrot.slane %v1845, 7
        %v1848 = vsel %vm244, %v1846, %v1847
        %v1849 = vsel %vm244, %v1847, %v1846
        %v1850 = vsel %vm827, %v1849, 0.0
        %v1851 = vsel %vm828, %v1848, 0.0
        %v1852 = vrot.slane %v1844, 1
        %v1853 = vrot.slane %v1845, 1
        %v1854 = vsel %vm293, %v1852, %v1853
        %v1855 = vsel %vm293, %v1853, %v1852
        %v1856 = vsel %vm839, %v1854, 0.0
        %v1857 = vsel %vm840, %v1855, 0.0
        %1860 = vrot.lane.b32.xlu0 %v1844, 16
        %v1861 = vpop.permute.xlu0 %1860
        %1862 = vrot.lane.b32.xlu0 %v1845, 16
        %v1863 = vpop.permute.xlu0 %1862
        %1868 = vrot.lane.b32.xlu0 %v1856, 32
        %v1869 = vpop.permute.xlu0 %1868
        %1870 = vrot.lane.b32.xlu0 %v1857, 32
        %v1871 = vpop.permute.xlu0 %1870
        %v1874 = vsel %vm684, %v1850, %v1861
        %v1875 = vsel %vm684, %v1851, %v1863
        %v1876 = vsel %vm861, %v1874, %v1869
        %v1877 = vsel %vm861, %v1875, %v1871
        %v1878 = vld [vmem:[#allocation3 + $0x178] sm:$0xff]
        %v1879 = vld [vmem:[#allocation3 + $0x180] sm:$0xff]
        %v1880 = vld [vmem:[#allocation3 + $0x188] sm:$0xff]
        %v1881 = vld [vmem:[#allocation3 + $0x190] sm:$0xff]
        %v1882 = vld [vmem:[#allocation3 + $0x198] sm:$0xff]
        %v1883 = vld [vmem:[#allocation3 + $0x1a0] sm:$0xff]
        %v1884 = vld [vmem:[#allocation3 + $0x1a8] sm:$0x1]
        %v1885 = vlaneseq
        %v1886 = vshrl.u32 %v1885, 7
        %v1887 = vsub.s32 0, %v1886
        %v1888 = vrot.slane %v1884, %v1887
        %v1890 = vsel %vm875, %v1876, 0
        %v1893 = vsel %vm875, %v1877, 0
        %1895 = vmatprep.subr.mxu0 0.0
        %1896 = vmatpush1.msra.mxu0 0.0
        %1897 = vmatprep.subr.mxu0 0.0
        %1898 = vmatpush1.msra.mxu0 0.0
        %1899 = vmatprep.subr.mxu0 0.0
        %1900 = vmatpush1.msra.mxu0 0.0
        %1901 = vmatprep.subr.mxu0 0.0
        %1902 = vmatpush1.msra.mxu0 0.0
        %1903 = vmatprep.subr.mxu0 0.0
        %1904 = vmatpush1.msra.mxu0 0.0
        %1905 = vmatprep.subr.mxu0 0.0
        %1906 = vmatpush1.msra.mxu0 0.0
        %1907 = vmatprep.subr.mxu0 0.0
        %1908 = vmatpush1.msra.mxu0 0.0
        %1909 = vmatprep.subr.mxu0 0.0
        %1910 = vmatpush1.msra.mxu0 0.0
        %1911 = vmatprep.subr.mxu0 0.0
        %1912 = vmatpush1.msra.mxu0 0.0
        %1913 = vmatprep.subr.mxu0 0.0
        %1914 = vmatpush1.msra.mxu0 0.0
        %1915 = vmatprep.subr.mxu0 0.0
        %1916 = vmatpush1.msra.mxu0 %v1883
        %1917 = vmatprep.subr.mxu0 0.0
        %1918 = vmatpush1.msra.mxu0 %v1882
        %1919 = vmatprep.subr.mxu0 0.0
        %1920 = vmatpush1.msra.mxu0 %v1881
        %1921 = vmatprep.subr.mxu0 0.0
        %1922 = vmatpush1.msra.mxu0 %v1880
        %1923 = vmatprep.subr.mxu0 0.0
        %1924 = vmatpush1.msra.mxu0 %v1879
        %1925 = vmatprep.subr.mxu0 0.0
        %1926 = vmatpush1.msra.mxu0 %v1878
        %1927 = vmatprep.subr.mxu0 0.0
        %1928 = vmatpush2.msra.mxu0 0.0
        %1929 = vmatprep.subr.mxu0 0.0
        %1930 = vmatpush2.msra.mxu0 0.0
        %1931 = vmatprep.subr.mxu0 0.0
        %1932 = vmatpush2.msra.mxu0 0.0
        %1933 = vmatprep.subr.mxu0 0.0
        %1934 = vmatpush2.msra.mxu0 0.0
        %1935 = vmatprep.subr.mxu0 0.0
        %1936 = vmatpush2.msra.mxu0 0.0
        %1937 = vmatprep.subr.mxu0 0.0
        %1938 = vmatpush2.msra.mxu0 0.0
        %1939 = vmatprep.subr.mxu0 0.0
        %1940 = vmatpush2.msra.mxu0 0.0
        %1941 = vmatprep.subr.mxu0 0.0
        %1942 = vmatpush2.msra.mxu0 0.0
        %1943 = vmatprep.subr.mxu0 0.0
        %1944 = vmatpush2.msra.mxu0 0.0
        %1945 = vmatprep.subr.mxu0 0.0
        %1946 = vmatpush2.msra.mxu0 0.0
        %1947 = vmatprep.subr.mxu0 0.0
        %1948 = vmatpush2.msra.mxu0 0.0
        %1949 = vmatprep.subr.mxu0 0.0
        %1950 = vmatpush2.msra.mxu0 0.0
        %1951 = vmatprep.subr.mxu0 0.0
        %1952 = vmatpush2.msra.mxu0 0.0
        %1953 = vmatprep.subr.mxu0 0.0
        %1954 = vmatpush2.msra.mxu0 0.0
        %1955 = vmatprep.subr.mxu0 0.0
        %1956 = vmatpush2.msra.mxu0 0.0
        %1957 = vmatprep.subr.mxu0 0.0
        %1958 = vmatpush2.msra.mxu0 0.0
        %1959 = vmatprep.mubr.f32.mxu0 0.0
        %1960 = vmatmul.mubr.f32.gmra.mxu0 %v1890
        %v1961 = vpop.f32.mrf.mxu0
        %v1962 = vadd.f32 %v1888, %v1961
        %v1963 = vpop.f32.mrf.mxu0
        %1964 = vmatprep.mubr.f32.mxu0 0.0
        %1965 = vmatmul.mubr.f32.gmra.mxu0 %v1893
        %v1966 = vpop.f32.mrf.mxu0
        %v1967 = vadd.f32 %v1888, %v1966
        %v1968 = vpop.f32.mrf.mxu0
        %1969 = vdwg.mxu0
        %vm1970 = vcmp.eq.s32.totalorder %v817, %v1206
        %vm1971 = vcmp.eq.s32.totalorder %v818, %v1206
        %1973 = vset.pattern.permute.xlu0 0
        %1974 = vperm.xlu0 %1973, %v1962
        %v1975 = vpop.permute.xlu0 %1974
        %1978 = vset.pattern.permute.xlu0 0
        %1979 = vperm.xlu0 %1978, %v1967
        %v1980 = vpop.permute.xlu0 %1979
        %v1982 = vsel %vm1970, %v1975, 0.0
        %v1983 = vsel %vm1971, %v1980, 0.0
        %v1984 = vmul.u32 %v212, 16
        %vm1985 = vcmp.ge.s32.totalorder %v1206, %v1984
        %v1986 = vmul.u32 %v1216, 16
        %vm1987 = vcmp.lt.s32.totalorder %v1206, %v1986
        %vm1988 = vmand %vm1985, %vm1987
        %v1989 = vsel %vm1988, 1, 0
        %v1990 = vcvt.s32.f32 %v1989
        %v1992 = vsel %vm684, %v1990, 0
        %1994 = vmatprep.subr.mxu0 0.0
        %1995 = vmatpush1.msra.mxu0 0.0
        %1996 = vmatprep.subr.mxu0 0.0
        %1997 = vmatpush1.msra.mxu0 0.0
        %1998 = vmatprep.subr.mxu0 0.0
        %1999 = vmatpush1.msra.mxu0 0.0
        %2000 = vmatprep.subr.mxu0 0.0
        %2001 = vmatpush1.msra.mxu0 0.0
        %2002 = vmatprep.subr.mxu0 0.0
        %2003 = vmatpush1.msra.mxu0 0.0
        %2004 = vmatprep.subr.mxu0 0.0
        %2005 = vmatpush1.msra.mxu0 0.0
        %2006 = vmatprep.subr.mxu0 0.0
        %2007 = vmatpush1.msra.mxu0 0.0
        %2008 = vmatprep.subr.mxu0 0.0
        %2009 = vmatpush1.msra.mxu0 0.0
        %2010 = vmatprep.subr.mxu0 0.0
        %2011 = vmatpush1.msra.mxu0 0.0
        %2012 = vmatprep.subr.mxu0 0.0
        %2013 = vmatpush1.msra.mxu0 0.0
        %2014 = vmatprep.subr.mxu0 0.0
        %2015 = vmatpush1.msra.mxu0 0.0
        %2016 = vmatprep.subr.mxu0 0.0
        %2017 = vmatpush1.msra.mxu0 0.0
        %2018 = vmatprep.subr.mxu0 0.0
        %2019 = vmatpush1.msra.mxu0 0.0
        %2020 = vmatprep.subr.mxu0 0.0
        %2021 = vmatpush1.msra.mxu0 0.0
        %2022 = vmatprep.subr.mxu0 0.0
        %2023 = vmatpush1.msra.mxu0 %v1983
        %2024 = vmatprep.subr.mxu0 0.0
        %2025 = vmatpush1.msra.mxu0 %v1982
        %2026 = vmatprep.subr.mxu0 0.0
        %2027 = vmatpush2.msra.mxu0 0.0
        %2028 = vmatprep.subr.mxu0 0.0
        %2029 = vmatpush2.msra.mxu0 0.0
        %2030 = vmatprep.subr.mxu0 0.0
        %2031 = vmatpush2.msra.mxu0 0.0
        %2032 = vmatprep.subr.mxu0 0.0
        %2033 = vmatpush2.msra.mxu0 0.0
        %2034 = vmatprep.subr.mxu0 0.0
        %2035 = vmatpush2.msra.mxu0 0.0
        %2036 = vmatprep.subr.mxu0 0.0
        %2037 = vmatpush2.msra.mxu0 0.0
        %2038 = vmatprep.subr.mxu0 0.0
        %2039 = vmatpush2.msra.mxu0 0.0
        %2040 = vmatprep.subr.mxu0 0.0
        %2041 = vmatpush2.msra.mxu0 0.0
        %2042 = vmatprep.subr.mxu0 0.0
        %2043 = vmatpush2.msra.mxu0 0.0
        %2044 = vmatprep.subr.mxu0 0.0
        %2045 = vmatpush2.msra.mxu0 0.0
        %2046 = vmatprep.subr.mxu0 0.0
        %2047 = vmatpush2.msra.mxu0 0.0
        %2048 = vmatprep.subr.mxu0 0.0
        %2049 = vmatpush2.msra.mxu0 0.0
        %2050 = vmatprep.subr.mxu0 0.0
        %2051 = vmatpush2.msra.mxu0 0.0
        %2052 = vmatprep.subr.mxu0 0.0
        %2053 = vmatpush2.msra.mxu0 0.0
        %2054 = vmatprep.subr.mxu0 0.0
        %2055 = vmatpush2.msra.mxu0 0.0
        %2056 = vmatprep.subr.mxu0 0.0
        %2057 = vmatpush2.msra.mxu0 0.0
        %2058 = vmatprep.mubr.f32.mxu0 0.0
        %2059 = vmatmul.mubr.f32.gmra.mxu0 %v1992
        %v2060 = vpop.f32.mrf.mxu0
        %v2061 = vadd.f32 0.0, %v2060
        %v2062 = vpop.f32.mrf.mxu0
        %2063 = vdwg.mxu0
        %v2064 = vld [vmem:[#allocation3 + $0x318] sm:$0xff]
        %v2065 = vld [vmem:[#allocation3 + $0x320] sm:$0xff]
        %v2066 = vld [vmem:[#allocation3 + $0x328] sm:$0x1]
        %v2068 = vsel %vm684, %v2061, 0
        %2070 = vmatprep.subr.mxu0 0.0
        %2071 = vmatpush1.msra.mxu0 0.0
        %2072 = vmatprep.subr.mxu0 0.0
        %2073 = vmatpush1.msra.mxu0 0.0
        %2074 = vmatprep.subr.mxu0 0.0
        %2075 = vmatpush1.msra.mxu0 0.0
        %2076 = vmatprep.subr.mxu0 0.0
        %2077 = vmatpush1.msra.mxu0 0.0
        %2078 = vmatprep.subr.mxu0 0.0
        %2079 = vmatpush1.msra.mxu0 0.0
        %2080 = vmatprep.subr.mxu0 0.0
        %2081 = vmatpush1.msra.mxu0 0.0
        %2082 = vmatprep.subr.mxu0 0.0
        %2083 = vmatpush1.msra.mxu0 0.0
        %2084 = vmatprep.subr.mxu0 0.0
        %2085 = vmatpush1.msra.mxu0 0.0
        %2086 = vmatprep.subr.mxu0 0.0
        %2087 = vmatpush1.msra.mxu0 0.0
        %2088 = vmatprep.subr.mxu0 0.0
        %2089 = vmatpush1.msra.mxu0 0.0
        %2090 = vmatprep.subr.mxu0 0.0
        %2091 = vmatpush1.msra.mxu0 0.0
        %2092 = vmatprep.subr.mxu0 0.0
        %2093 = vmatpush1.msra.mxu0 0.0
        %2094 = vmatprep.subr.mxu0 0.0
        %2095 = vmatpush1.msra.mxu0 0.0
        %2096 = vmatprep.subr.mxu0 0.0
        %2097 = vmatpush1.msra.mxu0 0.0
        %2098 = vmatprep.subr.mxu0 0.0
        %2099 = vmatpush1.msra.mxu0 %v2065
        %2100 = vmatprep.subr.mxu0 0.0
        %2101 = vmatpush1.msra.mxu0 %v2064
        %2102 = vmatprep.subr.mxu0 0.0
        %2103 = vmatpush2.msra.mxu0 0.0
        %2104 = vmatprep.subr.mxu0 0.0
        %2105 = vmatpush2.msra.mxu0 0.0
        %2106 = vmatprep.subr.mxu0 0.0
        %2107 = vmatpush2.msra.mxu0 0.0
        %2108 = vmatprep.subr.mxu0 0.0
        %2109 = vmatpush2.msra.mxu0 0.0
        %2110 = vmatprep.subr.mxu0 0.0
        %2111 = vmatpush2.msra.mxu0 0.0
        %2112 = vmatprep.subr.mxu0 0.0
        %2113 = vmatpush2.msra.mxu0 0.0
        %2114 = vmatprep.subr.mxu0 0.0
        %2115 = vmatpush2.msra.mxu0 0.0
        %2116 = vmatprep.subr.mxu0 0.0
        %2117 = vmatpush2.msra.mxu0 0.0
        %2118 = vmatprep.subr.mxu0 0.0
        %2119 = vmatpush2.msra.mxu0 0.0
        %2120 = vmatprep.subr.mxu0 0.0
        %2121 = vmatpush2.msra.mxu0 0.0
        %2122 = vmatprep.subr.mxu0 0.0
        %2123 = vmatpush2.msra.mxu0 0.0
        %2124 = vmatprep.subr.mxu0 0.0
        %2125 = vmatpush2.msra.mxu0 0.0
        %2126 = vmatprep.subr.mxu0 0.0
        %2127 = vmatpush2.msra.mxu0 0.0
        %2128 = vmatprep.subr.mxu0 0.0
        %2129 = vmatpush2.msra.mxu0 0.0
        %2130 = vmatprep.subr.mxu0 0.0
        %2131 = vmatpush2.msra.mxu0 0.0
        %2132 = vmatprep.subr.mxu0 0.0
        %2133 = vmatpush2.msra.mxu0 0.0
        %2134 = vmatprep.mubr.f32.mxu0 0.0
        %2135 = vmatmul.mubr.f32.gmra.mxu0 %v2068
        %v2136 = vpop.f32.mrf.mxu0
        %v2137 = vadd.f32 %v2066, %v2136
        %v2138 = vpop.f32.mrf.mxu0
        %2139 = vdwg.mxu0
        %v2140 = vmax.f32 %v2137, 0.0
        %v2141 = vld [vmem:[#allocation3 + $0x330] sm:$0xff]
        %v2142 = vld [vmem:[#allocation3 + $0x338] sm:$0xff]
        %v2143 = vld [vmem:[#allocation3 + $0x340] sm:$0xff]
        %v2144 = vld [vmem:[#allocation3 + $0x348] sm:$0xff]
        %v2145 = vld [vmem:[#allocation3 + $0x350] sm:$0x1]
        %v2147 = vsel %vm861, %v2140, 0
        %2149 = vmatprep.subr.mxu0 0.0
        %2150 = vmatpush1.msra.mxu0 0.0
        %2151 = vmatprep.subr.mxu0 0.0
        %2152 = vmatpush1.msra.mxu0 0.0
        %2153 = vmatprep.subr.mxu0 0.0
        %2154 = vmatpush1.msra.mxu0 0.0
        %2155 = vmatprep.subr.mxu0 0.0
        %2156 = vmatpush1.msra.mxu0 0.0
        %2157 = vmatprep.subr.mxu0 0.0
        %2158 = vmatpush1.msra.mxu0 0.0
        %2159 = vmatprep.subr.mxu0 0.0
        %2160 = vmatpush1.msra.mxu0 0.0
        %2161 = vmatprep.subr.mxu0 0.0
        %2162 = vmatpush1.msra.mxu0 0.0
        %2163 = vmatprep.subr.mxu0 0.0
        %2164 = vmatpush1.msra.mxu0 0.0
        %2165 = vmatprep.subr.mxu0 0.0
        %2166 = vmatpush1.msra.mxu0 0.0
        %2167 = vmatprep.subr.mxu0 0.0
        %2168 = vmatpush1.msra.mxu0 0.0
        %2169 = vmatprep.subr.mxu0 0.0
        %2170 = vmatpush1.msra.mxu0 0.0
        %2171 = vmatprep.subr.mxu0 0.0
        %2172 = vmatpush1.msra.mxu0 0.0
        %2173 = vmatprep.subr.mxu0 0.0
        %2174 = vmatpush1.msra.mxu0 %v2144
        %2175 = vmatprep.subr.mxu0 0.0
        %2176 = vmatpush1.msra.mxu0 %v2143
        %2177 = vmatprep.subr.mxu0 0.0
        %2178 = vmatpush1.msra.mxu0 %v2142
        %2179 = vmatprep.subr.mxu0 0.0
        %2180 = vmatpush1.msra.mxu0 %v2141
        %2181 = vmatprep.subr.mxu0 0.0
        %2182 = vmatpush2.msra.mxu0 0.0
        %2183 = vmatprep.subr.mxu0 0.0
        %2184 = vmatpush2.msra.mxu0 0.0
        %2185 = vmatprep.subr.mxu0 0.0
        %2186 = vmatpush2.msra.mxu0 0.0
        %2187 = vmatprep.subr.mxu0 0.0
        %2188 = vmatpush2.msra.mxu0 0.0
        %2189 = vmatprep.subr.mxu0 0.0
        %2190 = vmatpush2.msra.mxu0 0.0
        %2191 = vmatprep.subr.mxu0 0.0
        %2192 = vmatpush2.msra.mxu0 0.0
        %2193 = vmatprep.subr.mxu0 0.0
        %2194 = vmatpush2.msra.mxu0 0.0
        %2195 = vmatprep.subr.mxu0 0.0
        %2196 = vmatpush2.msra.mxu0 0.0
        %2197 = vmatprep.subr.mxu0 0.0
        %2198 = vmatpush2.msra.mxu0 0.0
        %2199 = vmatprep.subr.mxu0 0.0
        %2200 = vmatpush2.msra.mxu0 0.0
        %2201 = vmatprep.subr.mxu0 0.0
        %2202 = vmatpush2.msra.mxu0 0.0
        %2203 = vmatprep.subr.mxu0 0.0
        %2204 = vmatpush2.msra.mxu0 0.0
        %2205 = vmatprep.subr.mxu0 0.0
        %2206 = vmatpush2.msra.mxu0 0.0
        %2207 = vmatprep.subr.mxu0 0.0
        %2208 = vmatpush2.msra.mxu0 0.0
        %2209 = vmatprep.subr.mxu0 0.0
        %2210 = vmatpush2.msra.mxu0 0.0
        %2211 = vmatprep.subr.mxu0 0.0
        %2212 = vmatpush2.msra.mxu0 0.0
        %2213 = vmatprep.mubr.f32.mxu0 0.0
        %2214 = vmatmul.mubr.f32.gmra.mxu0 %v2147
        %v2215 = vpop.f32.mrf.mxu0
        %v2216 = vadd.f32 %v2145, %v2215
        %v2217 = vpop.f32.mrf.mxu0
        %2218 = vdwg.mxu0
        %v2220 = vsel %vm390, %v1221, 0
        %v2223 = vsel %vm440, %v1213, 0
        %2225 = vmatprep.subr.mxu0 0.0
        %2226 = vmatpush1.msra.mxu0 0.0
        %2227 = vmatprep.subr.mxu0 0.0
        %2228 = vmatpush1.msra.mxu0 0.0
        %2229 = vmatprep.subr.mxu0 0.0
        %2230 = vmatpush1.msra.mxu0 0.0
        %2231 = vmatprep.subr.mxu0 0.0
        %2232 = vmatpush1.msra.mxu0 0.0
        %2233 = vmatprep.subr.mxu0 0.0
        %2234 = vmatpush1.msra.mxu0 0.0
        %2235 = vmatprep.subr.mxu0 0.0
        %2236 = vmatpush1.msra.mxu0 0.0
        %2237 = vmatprep.subr.mxu0 0.0
        %2238 = vmatpush1.msra.mxu0 0.0
        %2239 = vmatprep.subr.mxu0 0.0
        %2240 = vmatpush1.msra.mxu0 0.0
        %2241 = vmatprep.subr.mxu0 0.0
        %2242 = vmatpush1.msra.mxu0 0.0
        %2243 = vmatprep.subr.mxu0 0.0
        %2244 = vmatpush1.msra.mxu0 0.0
        %2245 = vmatprep.subr.mxu0 0.0
        %2246 = vmatpush1.msra.mxu0 0.0
        %2247 = vmatprep.subr.mxu0 0.0
        %2248 = vmatpush1.msra.mxu0 0.0
        %2249 = vmatprep.subr.mxu0 0.0
        %2250 = vmatpush1.msra.mxu0 0.0
        %2251 = vmatprep.subr.mxu0 0.0
        %2252 = vmatpush1.msra.mxu0 0.0
        %2253 = vmatprep.subr.mxu0 0.0
        %2254 = vmatpush1.msra.mxu0 0.0
        %2255 = vmatprep.subr.mxu0 0.0
        %2256 = vmatpush1.msra.mxu0 %v2223
        %2257 = vmatprep.subr.mxu0 0.0
        %2258 = vmatpush2.msra.mxu0 0.0
        %2259 = vmatprep.subr.mxu0 0.0
        %2260 = vmatpush2.msra.mxu0 0.0
        %2261 = vmatprep.subr.mxu0 0.0
        %2262 = vmatpush2.msra.mxu0 0.0
        %2263 = vmatprep.subr.mxu0 0.0
        %2264 = vmatpush2.msra.mxu0 0.0
        %2265 = vmatprep.subr.mxu0 0.0
        %2266 = vmatpush2.msra.mxu0 0.0
        %2267 = vmatprep.subr.mxu0 0.0
        %2268 = vmatpush2.msra.mxu0 0.0
        %2269 = vmatprep.subr.mxu0 0.0
        %2270 = vmatpush2.msra.mxu0 0.0
        %2271 = vmatprep.subr.mxu0 0.0
        %2272 = vmatpush2.msra.mxu0 0.0
        %2273 = vmatprep.subr.mxu0 0.0
        %2274 = vmatpush2.msra.mxu0 0.0
        %2275 = vmatprep.subr.mxu0 0.0
        %2276 = vmatpush2.msra.mxu0 0.0
        %2277 = vmatprep.subr.mxu0 0.0
        %2278 = vmatpush2.msra.mxu0 0.0
        %2279 = vmatprep.subr.mxu0 0.0
        %2280 = vmatpush2.msra.mxu0 0.0
        %2281 = vmatprep.subr.mxu0 0.0
        %2282 = vmatpush2.msra.mxu0 0.0
        %2283 = vmatprep.subr.mxu0 0.0
        %2284 = vmatpush2.msra.mxu0 0.0
        %2285 = vmatprep.subr.mxu0 0.0
        %2286 = vmatpush2.msra.mxu0 0.0
        %2287 = vmatprep.subr.mxu0 0.0
        %2288 = vmatpush2.msra.mxu0 0.0
        %2289 = vmatprep.mubr.f32.mxu0 0.0
        %2290 = vmatmul.mubr.f32.gmra.mxu0 %v2220
        %v2291 = vpop.f32.mrf.mxu0
        %v2292 = vadd.f32 %v1493, %v2291
        %v2293 = vpop.f32.mrf.mxu0
        %2294 = vdwg.mxu0
        %v2295 = vadd.f32 %v2292, %v2216
        %v2296 = vld [vmem:[#allocation3 + $0x358] sm:$0xf]
        %v2297 = vld [vmem:[#allocation3 + $0x360] sm:$0x1]
        %v2299 = vsel %vm390, %v2295, 0
        %v2302 = vsel %vm440, %v2296, 0
        %2304 = vmatprep.subr.mxu0 0.0
        %2305 = vmatpush1.msra.mxu0 0.0
        %2306 = vmatprep.subr.mxu0 0.0
        %2307 = vmatpush1.msra.mxu0 0.0
        %2308 = vmatprep.subr.mxu0 0.0
        %2309 = vmatpush1.msra.mxu0 0.0
        %2310 = vmatprep.subr.mxu0 0.0
        %2311 = vmatpush1.msra.mxu0 0.0
        %2312 = vmatprep.subr.mxu0 0.0
        %2313 = vmatpush1.msra.mxu0 0.0
        %2314 = vmatprep.subr.mxu0 0.0
        %2315 = vmatpush1.msra.mxu0 0.0
        %2316 = vmatprep.subr.mxu0 0.0
        %2317 = vmatpush1.msra.mxu0 0.0
        %2318 = vmatprep.subr.mxu0 0.0
        %2319 = vmatpush1.msra.mxu0 0.0
        %2320 = vmatprep.subr.mxu0 0.0
        %2321 = vmatpush1.msra.mxu0 0.0
        %2322 = vmatprep.subr.mxu0 0.0
        %2323 = vmatpush1.msra.mxu0 0.0
        %2324 = vmatprep.subr.mxu0 0.0
        %2325 = vmatpush1.msra.mxu0 0.0
        %2326 = vmatprep.subr.mxu0 0.0
        %2327 = vmatpush1.msra.mxu0 0.0
        %2328 = vmatprep.subr.mxu0 0.0
        %2329 = vmatpush1.msra.mxu0 0.0
        %2330 = vmatprep.subr.mxu0 0.0
        %2331 = vmatpush1.msra.mxu0 0.0
        %2332 = vmatprep.subr.mxu0 0.0
        %2333 = vmatpush1.msra.mxu0 0.0
        %2334 = vmatprep.subr.mxu0 0.0
        %2335 = vmatpush1.msra.mxu0 %v2302
        %2336 = vmatprep.subr.mxu0 0.0
        %2337 = vmatpush2.msra.mxu0 0.0
        %2338 = vmatprep.subr.mxu0 0.0
        %2339 = vmatpush2.msra.mxu0 0.0
        %2340 = vmatprep.subr.mxu0 0.0
        %2341 = vmatpush2.msra.mxu0 0.0
        %2342 = vmatprep.subr.mxu0 0.0
        %2343 = vmatpush2.msra.mxu0 0.0
        %2344 = vmatprep.subr.mxu0 0.0
        %2345 = vmatpush2.msra.mxu0 0.0
        %2346 = vmatprep.subr.mxu0 0.0
        %2347 = vmatpush2.msra.mxu0 0.0
        %2348 = vmatprep.subr.mxu0 0.0
        %2349 = vmatpush2.msra.mxu0 0.0
        %2350 = vmatprep.subr.mxu0 0.0
        %2351 = vmatpush2.msra.mxu0 0.0
        %2352 = vmatprep.subr.mxu0 0.0
        %2353 = vmatpush2.msra.mxu0 0.0
        %2354 = vmatprep.subr.mxu0 0.0
        %2355 = vmatpush2.msra.mxu0 0.0
        %2356 = vmatprep.subr.mxu0 0.0
        %2357 = vmatpush2.msra.mxu0 0.0
        %2358 = vmatprep.subr.mxu0 0.0
        %2359 = vmatpush2.msra.mxu0 0.0
        %2360 = vmatprep.subr.mxu0 0.0
        %2361 = vmatpush2.msra.mxu0 0.0
        %2362 = vmatprep.subr.mxu0 0.0
        %2363 = vmatpush2.msra.mxu0 0.0
        %2364 = vmatprep.subr.mxu0 0.0
        %2365 = vmatpush2.msra.mxu0 0.0
        %2366 = vmatprep.subr.mxu0 0.0
        %2367 = vmatpush2.msra.mxu0 0.0
        %2368 = vmatprep.mubr.f32.mxu0 0.0
        %2369 = vmatmul.mubr.f32.gmra.mxu0 %v2299
        %v2370 = vpop.f32.mrf.mxu0
        %v2371 = vadd.f32 %v2297, %v2370
        %v2372 = vpop.f32.mrf.mxu0
        %2373 = vdwg.mxu0
        %2374 = vst [vmem:[%s191] sm:$0x1] %v2371
        %s2375 = sand.u32 %s99, 1
        %s2376 = scalar_lea.sflag [#allocation5], %s2375
        %s2377 = sand.u32 %s99, 1
        %s2378 = scalar_lea.vmem [#allocation6], %s2377
        // Predicated region
        $region37: #{tpu_custom_call.1} parent=31 // pred_check
          %p2379 = pneg %p109
        $region38: #{tpu_custom_call.1} parent=31 // pred_check_branch
          %2381 = sbr.rel (%p2379) target = $region40
        $region39: #{tpu_custom_call.1} parent=31 // pred_region
          %s2383 = ssub.s32 16, 16
          %2384 = vsyncadd %s2376, %s2383
          %s2385 = smul.addr %s18, 16
          %s2386 = scalar_lea.hbm %s3, %s2385
          %s2388 = sshll.u32 %s2378, 4
          %s2389 = int_to_ptr.vmem [resolvable:$true] %s2388
          %2391 = dma.vmem_to_hbm [thread:$0]  %s2389, 16, %s2386, %s2376
        $region40: #{tpu_custom_call.1} parent=31 // pred_fallthru
          _
      $region32: #{tpu_custom_call.1} parent=5 // pred_fallthru
        _
      %p2392 = scmp.le.s32.totalorder 2, %s13
      // Predicated region
      $region41: #{tpu_custom_call.1} parent=5 // pred_check
        %p2393 = pneg %p2392
      $region42: #{tpu_custom_call.1} parent=5 // pred_check_branch
        %2395 = sbr.rel (%p2393) target = $region44
      $region43: #{tpu_custom_call.1} parent=5 // pred_region
        %s2396 = ssub.s32 %s13, 2
        // Predicated region
        $region45: #{tpu_custom_call.1} parent=43 // pred_check
          %p2397 = pneg %p115
        $region46: #{tpu_custom_call.1} parent=43 // pred_check_branch
          %2399 = sbr.rel (%p2397) target = $region48
        $region47: #{tpu_custom_call.1} parent=43 // pred_region
          %s2400 = sand.u32 %s100, 1
          %s2401 = scalar_lea.sflag [#allocation5], %s2400
          %s2402 = sand.u32 %s100, 1
          %s2403 = scalar_lea.vmem [#allocation6], %s2402
          %2404 = dma.done %s2401, 16
        $region48: #{tpu_custom_call.1} parent=43 // pred_fallthru
          _
      $region44: #{tpu_custom_call.1} parent=5 // pred_fallthru
        _
    $region6: #{tpu_custom_call.1} parent=1 // loop_footer
      %s17 = sadd.s32 1, %s13
    $region7: #{tpu_custom_call.1} parent=1 // loop_footer_branch
      %12 = sbr.rel target = $region3
    $region8: #{tpu_custom_call.1} parent=1 // loop_exit
      _
    %2405 = vsyncpa [#allocation4], 1
    %s2406 = scalar_lea.sflag [#allocation4], 1
    %2407 = vsyncpa %s2406, 1
    %2408 = vsyncpa [#allocation5], 1
    %s2409 = scalar_lea.sflag [#allocation5], 1
    %2410 = vsyncpa %s2409, 1

</llo_original>
